<compile_context>
chip_gen: v5e
topology: v5e:2x2
jax: 0.10.0
libtpu: 0.0.40
codegen_flags: <defaults>
</compile_context>

<pallas_src>
import numpy as np
import jax
import jax.numpy as jnp
from jax.experimental import pallas as pl
from jax.experimental.pallas import tpu as pltpu

# ---- small configuration consistent with the module structure -------------
BATCH        = 2
SEQ_LEN      = 32                  # L
NUM_LEVELS   = 3                   # len(num_channels); every channel count = 1
KERNEL_SIZES = (3, 5, 7)           # [day, week, month] TCN kernel sizes (scaled down)
KGE_SIZE     = 32
KGE_SQUEEZE  = 5
NUM_TCN      = len(KERNEL_SIZES)
LINEAR_IN    = 1 * NUM_TCN + 2 + KGE_SQUEEZE   # num_channels[-1]*3 + 2 + kge_squeeze = 10
BATCH_BLOCK  = 8                   # fp32 sublane count; raise for large batches


def _tcn_dilations(kernel_size, num_levels):
    """Exact dilation-size logic of TemporalConvNet.__init__."""
    dils = []
    for i in range(num_levels):
        d = 2 ** i
        if kernel_size * d > 168:
            d = int(168 / kernel_size)
        dils.append(d)
    return tuple(dils)


DILATIONS = tuple(_tcn_dilations(k, NUM_LEVELS) for k in KERNEL_SIZES)


# ---------------------------- Pallas kernel --------------------------------
def _tcn_head(x, w1_ref, b1_ref, w2_ref, b2_ref, ksz, dilations):
    """TemporalConvNet with all channel counts == 1; returns tcn(x)[:, :, -1].

    All intermediates are jnp values (vregs) -- no VMEM scratch, no masked
    partial stores.  Weights are scalars read from flat SMEM arrays.
    """
    _, L = x.shape
    h = x
    for lvl, d in enumerate(dilations):
        p = (ksz - 1) * d                      # Conv1d padding of this TemporalBlock
        # conv1: circular pad, dilated conv, ReLU (Chomp1d no-op, Dropout identity)
        L1 = L + p
        hp = jnp.concatenate([h[:, L - p:], h, h[:, :p]], axis=1)      # (B, L+2p)
        acc1 = w1_ref[lvl * ksz] * hp[:, 0:L1]                          # first tap init
        for k in range(1, ksz):
            acc1 = acc1 + w1_ref[lvl * ksz + k] * hp[:, k * d:k * d + L1]
        a1 = jnp.maximum(acc1 + b1_ref[lvl], 0.0)
        # conv2: circular pad, dilated conv, ReLU
        L2 = L1 + p
        ap = jnp.concatenate([a1[:, L1 - p:], a1, a1[:, :p]], axis=1)  # (B, L1+2p)
        acc2 = w2_ref[lvl * ksz] * ap[:, 0:L2]
        for k in range(1, ksz):
            acc2 = acc2 + w2_ref[lvl * ksz + k] * ap[:, k * d:k * d + L2]
        a2 = jnp.maximum(acc2 + b2_ref[lvl], 0.0)
        # TemporalBlock: keep middle L samples, residual (downsample=None), ReLU
        h = jnp.maximum(a2[:, p:p + L] + h, 0.0)
    return h[:, L - 1:L]                       # (B, 1)


def _discriminator_kernel(*refs):
    x_ref, kge_ref = refs[0], refs[1]
    conv_refs = refs[2:2 + 4 * NUM_TCN]
    wk_ref   = refs[2 + 4 * NUM_TCN]           # (1, KGE)   folded kge weights (VMEM)
    wlin_ref = refs[3 + 4 * NUM_TCN]           # (5,)       head/mean/min weights (SMEM)
    beff_ref = refs[4 + 4 * NUM_TCN]           # (1,)       folded bias (SMEM)
    out_ref  = refs[5 + 4 * NUM_TCN]

    x = x_ref[...]                             # (Bblk, L)   float32
    kge = kge_ref[...]                         # (Bblk, KGE) float32

    x_mean = jnp.mean(x, axis=1, keepdims=True)   # x.mean(2)
    x_min  = jnp.min(x, axis=1, keepdims=True)    # x.min(2).values

    # kge contribution (linear_kge folded into final linear) + folded bias
    logit = jnp.sum(kge * wk_ref[...], axis=1, keepdims=True) + beff_ref[0]

    # three independent TCN heads (pure value dataflow, interleavable)
    for t in range(NUM_TCN):
        w1_ref, b1_ref, w2_ref, b2_ref = conv_refs[4 * t:4 * t + 4]
        head = _tcn_head(x, w1_ref, b1_ref, w2_ref, b2_ref,
                         KERNEL_SIZES[t], DILATIONS[t])
        logit = logit + head * wlin_ref[t]

    logit = logit + x_mean * wlin_ref[NUM_TCN] + x_min * wlin_ref[NUM_TCN + 1]
    out_ref[...] = jax.nn.sigmoid(logit)


# ------------------------------- wrapper ------------------------------------
def discriminator_tcn0_forward(x_bl, kge, params, *, batch_block=BATCH_BLOCK):
    B, L = x_bl.shape
    # PyTorch circular padding requires pad <= input length for the first conv.
    for ksz, dils in zip(KERNEL_SIZES, DILATIONS):
        for d in dils:
            if (ksz - 1) * d > L:
                raise ValueError(
                    f"circular padding {(ksz - 1) * d} exceeds sequence length {L}")

    # ---- host-side exact fold of linear_kge into the final linear ---------
    n_feat = NUM_TCN + 2
    wlin, wkge, bkge, blin = params["wlin"], params["wkge"], params["bkge"], params["blin"]
    w_head    = wlin[0, :n_feat].astype(jnp.float32)                    # (5,)
    w_kge_eff = (wlin[:, n_feat:] @ wkge).astype(jnp.float32)           # (1, KGE)
    b_eff     = jnp.reshape(blin.reshape(()) + jnp.dot(wlin[0, n_feat:], bkge[0]),
                            (1,)).astype(jnp.float32)                   # (1,)

    # ---- pad batch to fill sublanes / batch blocks -------------------------
    bblk = batch_block
    B_pad = ((B + bblk - 1) // bblk) * bblk
    if B_pad != B:
        x_p   = jnp.zeros((B_pad, L), jnp.float32).at[:B].set(x_bl)
        kge_p = jnp.zeros((B_pad, KGE_SIZE), jnp.float32).at[:B].set(kge)
    else:
        x_p, kge_p = x_bl.astype(jnp.float32), kge.astype(jnp.float32)

    grid = (B_pad // bblk,)
    smem = pl.BlockSpec(memory_space=pltpu.MemorySpace.SMEM)

    inputs   = [x_p, kge_p]
    in_specs = [pl.BlockSpec((bblk, L), lambda i: (i, 0)),
                pl.BlockSpec((bblk, KGE_SIZE), lambda i: (i, 0))]
    for t in range(NUM_TCN):
        for name in ("w1", "b1", "w2", "b2"):
            inputs.append(params[f"tcn{t}_{name}"].reshape(-1).astype(jnp.float32))
            in_specs.append(smem)              # flat 1-D SMEM scalar tables
    inputs   += [w_kge_eff, w_head, b_eff]
    in_specs += [pl.BlockSpec((1, KGE_SIZE), lambda i: (0, 0)), smem, smem]

    out = pl.pallas_call(
        _discriminator_kernel,
        out_shape=jax.ShapeDtypeStruct((B_pad, 1), jnp.float32),
        grid=grid,
        in_specs=in_specs,
        out_specs=pl.BlockSpec((bblk, 1), lambda i: (i, 0)),
        compiler_params=pltpu.CompilerParams(dimension_semantics=("parallel",)),
    )(*inputs)
    return out[:B]


# -------------------- deterministic parameter initialisation ----------------
def init_params(key):
    keys = iter(jax.random.split(key, 4 * NUM_TCN + 4))
    params = {}
    for t, K in enumerate(KERNEL_SIZES):
        # effective (weight-normalised) conv weights ~ N(0, 0.01), per init_weights()
        params[f"tcn{t}_w1"] = 0.01 * jax.random.normal(next(keys), (NUM_LEVELS, K), jnp.float32)
        params[f"tcn{t}_b1"] = 0.05 * jax.random.normal(next(keys), (NUM_LEVELS, 1), jnp.float32)
        params[f"tcn{t}_w2"] = 0.01 * jax.random.normal(next(keys), (NUM_LEVELS, K), jnp.float32)
        params[f"tcn{t}_b2"] = 0.05 * jax.random.normal(next(keys), (NUM_LEVELS, 1), jnp.float32)
    params["wkge"] = 0.1 * jax.random.normal(next(keys), (KGE_SQUEEZE, KGE_SIZE), jnp.float32)
    params["bkge"] = 0.1 * jax.random.normal(next(keys), (1, KGE_SQUEEZE), jnp.float32)
    params["wlin"] = 0.01 * jax.random.normal(next(keys), (1, LINEAR_IN), jnp.float32)
    params["blin"] = 0.01 * jax.random.normal(next(keys), (1, 1), jnp.float32)
    return params


# ----------------------- pure-JAX reference (for checking) ------------------
def reference_forward(x_bl, kge, params):
    def run_tcn(x, w1, b1, w2, b2, K, dils):
        L = x.shape[1]
        h = x
        for lvl, d in enumerate(dils):
            p = (K - 1) * d
            hp = jnp.concatenate([h[:, L - p:], h, h[:, :p]], axis=1)
            L1 = L + p
            c1 = sum(w1[lvl, k] * hp[:, k * d:k * d + L1] for k in range(K)) + b1[lvl, 0]
            a1 = jnp.maximum(c1, 0.0)
            ap = jnp.concatenate([a1[:, L1 - p:], a1, a1[:, :p]], axis=1)
            L2 = L1 + p
            c2 = sum(w2[lvl, k] * ap[:, k * d:k * d + L2] for k in range(K)) + b2[lvl, 0]
            a2 = jnp.maximum(c2, 0.0)
            h = jnp.maximum(a2[:, p:p + L] + h, 0.0)
        return h[:, -1:]

    heads = [run_tcn(x_bl, params[f"tcn{t}_w1"], params[f"tcn{t}_b1"],
                     params[f"tcn{t}_w2"], params[f"tcn{t}_b2"],
                     KERNEL_SIZES[t], DILATIONS[t]) for t in range(NUM_TCN)]
    x_mean = jnp.mean(x_bl, axis=1, keepdims=True)
    x_min = jnp.min(x_bl, axis=1, keepdims=True)
    kge_sq = jnp.sum(kge[:, None, :] * params["wkge"][None, :, :], axis=2) + params["bkge"]
    feat = jnp.concatenate(heads + [x_mean, x_min, kge_sq], axis=1)      # (B, 10)
    logit = jnp.sum(feat * params["wlin"], axis=1, keepdims=True) + params["blin"]
    return jax.nn.sigmoid(logit)


if __name__ == "__main__":
    root = jax.random.PRNGKey(0)
    kx, kkge, kp = jax.random.split(root, 3)
    x_ncl = jax.random.normal(kx, (BATCH, 1, SEQ_LEN), jnp.float32)   # PyTorch NCL input
    kge = jax.random.normal(kkge, (BATCH, KGE_SIZE), jnp.float32)
    params = init_params(kp)

    x_bl = x_ncl[:, 0, :]   # (B, L): channel dim (== 1) squeezed in glue

    out = discriminator_tcn0_forward(x_bl, kge, params)
    out = jax.block_until_ready(out)

    ref = reference_forward(x_bl, kge, params)
    np.testing.assert_allclose(np.asarray(out), np.asarray(ref), rtol=1e-4, atol=1e-4)
    print("KERNEL_OK")
</pallas_src>

<mosaic_0001>
module attributes {stable_mosaic.version = 11 : i64} {
  func.func @_discriminator_kernel(%arg0: i32, %arg1: memref<8x32xf32, #tpu.memory_space<vmem>>, %arg2: memref<8x32xf32, #tpu.memory_space<vmem>>, %arg3: memref<9xf32, #tpu.memory_space<smem>>, %arg4: memref<3xf32, #tpu.memory_space<smem>>, %arg5: memref<9xf32, #tpu.memory_space<smem>>, %arg6: memref<3xf32, #tpu.memory_space<smem>>, %arg7: memref<15xf32, #tpu.memory_space<smem>>, %arg8: memref<3xf32, #tpu.memory_space<smem>>, %arg9: memref<15xf32, #tpu.memory_space<smem>>, %arg10: memref<3xf32, #tpu.memory_space<smem>>, %arg11: memref<21xf32, #tpu.memory_space<smem>>, %arg12: memref<3xf32, #tpu.memory_space<smem>>, %arg13: memref<21xf32, #tpu.memory_space<smem>>, %arg14: memref<3xf32, #tpu.memory_space<smem>>, %arg15: memref<1x32xf32, #tpu.memory_space<vmem>>, %arg16: memref<5xf32, #tpu.memory_space<smem>>, %arg17: memref<1xf32, #tpu.memory_space<smem>>, %arg18: memref<8x1xf32, #tpu.memory_space<vmem>>) attributes {dimension_semantics = [#tpu.dimension_semantics<parallel>], iteration_bounds = array<i64: 1>, scalar_prefetch = 0 : i64, scratch_operands = 0 : i64, tpu.core_type = #tpu.core_type<tc>, window_params = [{transform_indices = @transform_0, window_bounds = array<i64: 8, 32>}, {transform_indices = @transform_1, window_bounds = array<i64: 8, 32>}, {transform_indices = @transform_2, window_bounds = array<i64: 9>}, {transform_indices = @transform_3, window_bounds = array<i64: 3>}, {transform_indices = @transform_4, window_bounds = array<i64: 9>}, {transform_indices = @transform_5, window_bounds = array<i64: 3>}, {transform_indices = @transform_6, window_bounds = array<i64: 15>}, {transform_indices = @transform_7, window_bounds = array<i64: 3>}, {transform_indices = @transform_8, window_bounds = array<i64: 15>}, {transform_indices = @transform_9, window_bounds = array<i64: 3>}, {transform_indices = @transform_10, window_bounds = array<i64: 21>}, {transform_indices = @transform_11, window_bounds = array<i64: 3>}, {transform_indices = @transform_12, window_bounds = array<i64: 21>}, {transform_indices = @transform_13, window_bounds = array<i64: 3>}, {pipeline_mode = #tpu.pipeline_mode<synchronous>, transform_indices = @transform_14, window_bounds = array<i64: 1, 32>}, {transform_indices = @transform_15, window_bounds = array<i64: 5>}, {transform_indices = @transform_16, window_bounds = array<i64: 1>}, {transform_indices = @transform_17, window_bounds = array<i64: 8, 1>}]} {
    %c0 = arith.constant 0 : index
    %c0_0 = arith.constant 0 : index
    %0 = vector.load %arg1[%c0, %c0_0] : memref<8x32xf32, #tpu.memory_space<vmem>>, vector<8x32xf32>
    %c0_1 = arith.constant 0 : index
    %c0_2 = arith.constant 0 : index
    %1 = vector.load %arg2[%c0_1, %c0_2] : memref<8x32xf32, #tpu.memory_space<vmem>>, vector<8x32xf32>
    %cst = arith.constant dense<0.000000e+00> : vector<8xf32>
    %2 = vector.multi_reduction <add>, %0, %cst [1] : vector<8x32xf32> to vector<8xf32>
    %3 = vector.shape_cast %2 : vector<8xf32> to vector<8x1xf32>
    %cst_3 = arith.constant 3.200000e+01 : f32
    %4 = vector.broadcast %cst_3 : f32 to vector<8x1xf32>
    %5 = arith.divf %3, %4 : vector<8x1xf32>
    %cst_4 = arith.constant dense<0x7F800000> : vector<8xf32>
    %6 = vector.multi_reduction <minimumf>, %0, %cst_4 [1] : vector<8x32xf32> to vector<8xf32>
    %7 = vector.shape_cast %6 : vector<8xf32> to vector<8x1xf32>
    %c0_5 = arith.constant 0 : index
    %c0_6 = arith.constant 0 : index
    %8 = vector.load %arg15[%c0_5, %c0_6] : memref<1x32xf32, #tpu.memory_space<vmem>>, vector<1x32xf32>
    %9 = vector.broadcast %8 : vector<1x32xf32> to vector<8x32xf32>
    %10 = arith.mulf %1, %9 : vector<8x32xf32>
    %cst_7 = arith.constant dense<0.000000e+00> : vector<8xf32>
    %11 = vector.multi_reduction <add>, %10, %cst_7 [1] : vector<8x32xf32> to vector<8xf32>
    %12 = vector.shape_cast %11 : vector<8xf32> to vector<8x1xf32>
    %c0_8 = arith.constant 0 : index
    %13 = memref.load %arg17[%c0_8] : memref<1xf32, #tpu.memory_space<smem>>
    %14 = vector.broadcast %13 : f32 to vector<8x1xf32>
    %15 = arith.addf %12, %14 : vector<8x1xf32>
    %16 = vector.extract_strided_slice %0 {offsets = [0, 30], sizes = [8, 2], strides = [1, 1]} : vector<8x32xf32> to vector<8x2xf32>
    %17 = vector.extract_strided_slice %0 {offsets = [0, 0], sizes = [8, 2], strides = [1, 1]} : vector<8x32xf32> to vector<8x2xf32>
    %18 = tpu.concatenate %16, %0, %17 in 1 : vector<8x2xf32>, vector<8x32xf32>, vector<8x2xf32> -> vector<8x36xf32>
    %c0_9 = arith.constant 0 : index
    %19 = memref.load %arg3[%c0_9] : memref<9xf32, #tpu.memory_space<smem>>
    %20 = vector.extract_strided_slice %18 {offsets = [0, 0], sizes = [8, 34], strides = [1, 1]} : vector<8x36xf32> to vector<8x34xf32>
    %21 = vector.broadcast %19 : f32 to vector<8x34xf32>
    %22 = arith.mulf %21, %20 : vector<8x34xf32>
    %c1 = arith.constant 1 : index
    %23 = memref.load %arg3[%c1] : memref<9xf32, #tpu.memory_space<smem>>
    %24 = vector.extract_strided_slice %18 {offsets = [0, 1], sizes = [8, 34], strides = [1, 1]} : vector<8x36xf32> to vector<8x34xf32>
    %25 = vector.broadcast %23 : f32 to vector<8x34xf32>
    %26 = arith.mulf %25, %24 : vector<8x34xf32>
    %27 = arith.addf %22, %26 : vector<8x34xf32>
    %c2 = arith.constant 2 : index
    %28 = memref.load %arg3[%c2] : memref<9xf32, #tpu.memory_space<smem>>
    %29 = vector.extract_strided_slice %18 {offsets = [0, 2], sizes = [8, 34], strides = [1, 1]} : vector<8x36xf32> to vector<8x34xf32>
    %30 = vector.broadcast %28 : f32 to vector<8x34xf32>
    %31 = arith.mulf %30, %29 : vector<8x34xf32>
    %32 = arith.addf %27, %31 : vector<8x34xf32>
    %c0_10 = arith.constant 0 : index
    %33 = memref.load %arg4[%c0_10] : memref<3xf32, #tpu.memory_space<smem>>
    %34 = vector.broadcast %33 : f32 to vector<8x34xf32>
    %35 = arith.addf %32, %34 : vector<8x34xf32>
    %cst_11 = arith.constant 0.000000e+00 : f32
    %36 = vector.broadcast %cst_11 : f32 to vector<8x34xf32>
    %37 = arith.maximumf %35, %36 : vector<8x34xf32>
    %38 = vector.extract_strided_slice %37 {offsets = [0, 32], sizes = [8, 2], strides = [1, 1]} : vector<8x34xf32> to vector<8x2xf32>
    %39 = vector.extract_strided_slice %37 {offsets = [0, 0], sizes = [8, 2], strides = [1, 1]} : vector<8x34xf32> to vector<8x2xf32>
    %40 = tpu.concatenate %38, %37, %39 in 1 : vector<8x2xf32>, vector<8x34xf32>, vector<8x2xf32> -> vector<8x38xf32>
    %c0_12 = arith.constant 0 : index
    %41 = memref.load %arg5[%c0_12] : memref<9xf32, #tpu.memory_space<smem>>
    %42 = vector.extract_strided_slice %40 {offsets = [0, 0], sizes = [8, 36], strides = [1, 1]} : vector<8x38xf32> to vector<8x36xf32>
    %43 = vector.broadcast %41 : f32 to vector<8x36xf32>
    %44 = arith.mulf %43, %42 : vector<8x36xf32>
    %c1_13 = arith.constant 1 : index
    %45 = memref.load %arg5[%c1_13] : memref<9xf32, #tpu.memory_space<smem>>
    %46 = vector.extract_strided_slice %40 {offsets = [0, 1], sizes = [8, 36], strides = [1, 1]} : vector<8x38xf32> to vector<8x36xf32>
    %47 = vector.broadcast %45 : f32 to vector<8x36xf32>
    %48 = arith.mulf %47, %46 : vector<8x36xf32>
    %49 = arith.addf %44, %48 : vector<8x36xf32>
    %c2_14 = arith.constant 2 : index
    %50 = memref.load %arg5[%c2_14] : memref<9xf32, #tpu.memory_space<smem>>
    %51 = vector.extract_strided_slice %40 {offsets = [0, 2], sizes = [8, 36], strides = [1, 1]} : vector<8x38xf32> to vector<8x36xf32>
    %52 = vector.broadcast %50 : f32 to vector<8x36xf32>
    %53 = arith.mulf %52, %51 : vector<8x36xf32>
    %54 = arith.addf %49, %53 : vector<8x36xf32>
    %c0_15 = arith.constant 0 : index
    %55 = memref.load %arg6[%c0_15] : memref<3xf32, #tpu.memory_space<smem>>
    %56 = vector.broadcast %55 : f32 to vector<8x36xf32>
    %57 = arith.addf %54, %56 : vector<8x36xf32>
    %cst_16 = arith.constant 0.000000e+00 : f32
    %58 = vector.broadcast %cst_16 : f32 to vector<8x36xf32>
    %59 = arith.maximumf %57, %58 : vector<8x36xf32>
    %60 = vector.extract_strided_slice %59 {offsets = [0, 2], sizes = [8, 32], strides = [1, 1]} : vector<8x36xf32> to vector<8x32xf32>
    %61 = arith.addf %60, %0 : vector<8x32xf32>
    %cst_17 = arith.constant 0.000000e+00 : f32
    %62 = vector.broadcast %cst_17 : f32 to vector<8x32xf32>
    %63 = arith.maximumf %61, %62 : vector<8x32xf32>
    %64 = vector.extract_strided_slice %63 {offsets = [0, 28], sizes = [8, 4], strides = [1, 1]} : vector<8x32xf32> to vector<8x4xf32>
    %65 = vector.extract_strided_slice %63 {offsets = [0, 0], sizes = [8, 4], strides = [1, 1]} : vector<8x32xf32> to vector<8x4xf32>
    %66 = tpu.concatenate %64, %63, %65 in 1 : vector<8x4xf32>, vector<8x32xf32>, vector<8x4xf32> -> vector<8x40xf32>
    %c3 = arith.constant 3 : index
    %67 = memref.load %arg3[%c3] : memref<9xf32, #tpu.memory_space<smem>>
    %68 = vector.extract_strided_slice %66 {offsets = [0, 0], sizes = [8, 36], strides = [1, 1]} : vector<8x40xf32> to vector<8x36xf32>
    %69 = vector.broadcast %67 : f32 to vector<8x36xf32>
    %70 = arith.mulf %69, %68 : vector<8x36xf32>
    %c4 = arith.constant 4 : index
    %71 = memref.load %arg3[%c4] : memref<9xf32, #tpu.memory_space<smem>>
    %72 = vector.extract_strided_slice %66 {offsets = [0, 2], sizes = [8, 36], strides = [1, 1]} : vector<8x40xf32> to vector<8x36xf32>
    %73 = vector.broadcast %71 : f32 to vector<8x36xf32>
    %74 = arith.mulf %73, %72 : vector<8x36xf32>
    %75 = arith.addf %70, %74 : vector<8x36xf32>
    %c5 = arith.constant 5 : index
    %76 = memref.load %arg3[%c5] : memref<9xf32, #tpu.memory_space<smem>>
    %77 = vector.extract_strided_slice %66 {offsets = [0, 4], sizes = [8, 36], strides = [1, 1]} : vector<8x40xf32> to vector<8x36xf32>
    %78 = vector.broadcast %76 : f32 to vector<8x36xf32>
    %79 = arith.mulf %78, %77 : vector<8x36xf32>
    %80 = arith.addf %75, %79 : vector<8x36xf32>
    %c1_18 = arith.constant 1 : index
    %81 = memref.load %arg4[%c1_18] : memref<3xf32, #tpu.memory_space<smem>>
    %82 = vector.broadcast %81 : f32 to vector<8x36xf32>
    %83 = arith.addf %80, %82 : vector<8x36xf32>
    %cst_19 = arith.constant 0.000000e+00 : f32
    %84 = vector.broadcast %cst_19 : f32 to vector<8x36xf32>
    %85 = arith.maximumf %83, %84 : vector<8x36xf32>
    %86 = vector.extract_strided_slice %85 {offsets = [0, 32], sizes = [8, 4], strides = [1, 1]} : vector<8x36xf32> to vector<8x4xf32>
    %87 = vector.extract_strided_slice %85 {offsets = [0, 0], sizes = [8, 4], strides = [1, 1]} : vector<8x36xf32> to vector<8x4xf32>
    %88 = tpu.concatenate %86, %85, %87 in 1 : vector<8x4xf32>, vector<8x36xf32>, vector<8x4xf32> -> vector<8x44xf32>
    %c3_20 = arith.constant 3 : index
    %89 = memref.load %arg5[%c3_20] : memref<9xf32, #tpu.memory_space<smem>>
    %90 = vector.extract_strided_slice %88 {offsets = [0, 0], sizes = [8, 40], strides = [1, 1]} : vector<8x44xf32> to vector<8x40xf32>
    %91 = vector.broadcast %89 : f32 to vector<8x40xf32>
    %92 = arith.mulf %91, %90 : vector<8x40xf32>
    %c4_21 = arith.constant 4 : index
    %93 = memref.load %arg5[%c4_21] : memref<9xf32, #tpu.memory_space<smem>>
    %94 = vector.extract_strided_slice %88 {offsets = [0, 2], sizes = [8, 40], strides = [1, 1]} : vector<8x44xf32> to vector<8x40xf32>
    %95 = vector.broadcast %93 : f32 to vector<8x40xf32>
    %96 = arith.mulf %95, %94 : vector<8x40xf32>
    %97 = arith.addf %92, %96 : vector<8x40xf32>
    %c5_22 = arith.constant 5 : index
    %98 = memref.load %arg5[%c5_22] : memref<9xf32, #tpu.memory_space<smem>>
    %99 = vector.extract_strided_slice %88 {offsets = [0, 4], sizes = [8, 40], strides = [1, 1]} : vector<8x44xf32> to vector<8x40xf32>
    %100 = vector.broadcast %98 : f32 to vector<8x40xf32>
    %101 = arith.mulf %100, %99 : vector<8x40xf32>
    %102 = arith.addf %97, %101 : vector<8x40xf32>
    %c1_23 = arith.constant 1 : index
    %103 = memref.load %arg6[%c1_23] : memref<3xf32, #tpu.memory_space<smem>>
    %104 = vector.broadcast %103 : f32 to vector<8x40xf32>
    %105 = arith.addf %102, %104 : vector<8x40xf32>
    %cst_24 = arith.constant 0.000000e+00 : f32
    %106 = vector.broadcast %cst_24 : f32 to vector<8x40xf32>
    %107 = arith.maximumf %105, %106 : vector<8x40xf32>
    %108 = vector.extract_strided_slice %107 {offsets = [0, 4], sizes = [8, 32], strides = [1, 1]} : vector<8x40xf32> to vector<8x32xf32>
    %109 = arith.addf %108, %63 : vector<8x32xf32>
    %cst_25 = arith.constant 0.000000e+00 : f32
    %110 = vector.broadcast %cst_25 : f32 to vector<8x32xf32>
    %111 = arith.maximumf %109, %110 : vector<8x32xf32>
    %112 = vector.extract_strided_slice %111 {offsets = [0, 24], sizes = [8, 8], strides = [1, 1]} : vector<8x32xf32> to vector<8x8xf32>
    %113 = vector.extract_strided_slice %111 {offsets = [0, 0], sizes = [8, 8], strides = [1, 1]} : vector<8x32xf32> to vector<8x8xf32>
    %114 = tpu.concatenate %112, %111, %113 in 1 : vector<8x8xf32>, vector<8x32xf32>, vector<8x8xf32> -> vector<8x48xf32>
    %c6 = arith.constant 6 : index
    %115 = memref.load %arg3[%c6] : memref<9xf32, #tpu.memory_space<smem>>
    %116 = vector.extract_strided_slice %114 {offsets = [0, 0], sizes = [8, 40], strides = [1, 1]} : vector<8x48xf32> to vector<8x40xf32>
    %117 = vector.broadcast %115 : f32 to vector<8x40xf32>
    %118 = arith.mulf %117, %116 : vector<8x40xf32>
    %c7 = arith.constant 7 : index
    %119 = memref.load %arg3[%c7] : memref<9xf32, #tpu.memory_space<smem>>
    %120 = vector.extract_strided_slice %114 {offsets = [0, 4], sizes = [8, 40], strides = [1, 1]} : vector<8x48xf32> to vector<8x40xf32>
    %121 = vector.broadcast %119 : f32 to vector<8x40xf32>
    %122 = arith.mulf %121, %120 : vector<8x40xf32>
    %123 = arith.addf %118, %122 : vector<8x40xf32>
    %c8 = arith.constant 8 : index
    %124 = memref.load %arg3[%c8] : memref<9xf32, #tpu.memory_space<smem>>
    %125 = vector.extract_strided_slice %114 {offsets = [0, 8], sizes = [8, 40], strides = [1, 1]} : vector<8x48xf32> to vector<8x40xf32>
    %126 = vector.broadcast %124 : f32 to vector<8x40xf32>
    %127 = arith.mulf %126, %125 : vector<8x40xf32>
    %128 = arith.addf %123, %127 : vector<8x40xf32>
    %c2_26 = arith.constant 2 : index
    %129 = memref.load %arg4[%c2_26] : memref<3xf32, #tpu.memory_space<smem>>
    %130 = vector.broadcast %129 : f32 to vector<8x40xf32>
    %131 = arith.addf %128, %130 : vector<8x40xf32>
    %cst_27 = arith.constant 0.000000e+00 : f32
    %132 = vector.broadcast %cst_27 : f32 to vector<8x40xf32>
    %133 = arith.maximumf %131, %132 : vector<8x40xf32>
    %134 = vector.extract_strided_slice %133 {offsets = [0, 32], sizes = [8, 8], strides = [1, 1]} : vector<8x40xf32> to vector<8x8xf32>
    %135 = vector.extract_strided_slice %133 {offsets = [0, 0], sizes = [8, 8], strides = [1, 1]} : vector<8x40xf32> to vector<8x8xf32>
    %136 = tpu.concatenate %134, %133, %135 in 1 : vector<8x8xf32>, vector<8x40xf32>, vector<8x8xf32> -> vector<8x56xf32>
    %c6_28 = arith.constant 6 : index
    %137 = memref.load %arg5[%c6_28] : memref<9xf32, #tpu.memory_space<smem>>
    %138 = vector.extract_strided_slice %136 {offsets = [0, 0], sizes = [8, 48], strides = [1, 1]} : vector<8x56xf32> to vector<8x48xf32>
    %139 = vector.broadcast %137 : f32 to vector<8x48xf32>
    %140 = arith.mulf %139, %138 : vector<8x48xf32>
    %c7_29 = arith.constant 7 : index
    %141 = memref.load %arg5[%c7_29] : memref<9xf32, #tpu.memory_space<smem>>
    %142 = vector.extract_strided_slice %136 {offsets = [0, 4], sizes = [8, 48], strides = [1, 1]} : vector<8x56xf32> to vector<8x48xf32>
    %143 = vector.broadcast %141 : f32 to vector<8x48xf32>
    %144 = arith.mulf %143, %142 : vector<8x48xf32>
    %145 = arith.addf %140, %144 : vector<8x48xf32>
    %c8_30 = arith.constant 8 : index
    %146 = memref.load %arg5[%c8_30] : memref<9xf32, #tpu.memory_space<smem>>
    %147 = vector.extract_strided_slice %136 {offsets = [0, 8], sizes = [8, 48], strides = [1, 1]} : vector<8x56xf32> to vector<8x48xf32>
    %148 = vector.broadcast %146 : f32 to vector<8x48xf32>
    %149 = arith.mulf %148, %147 : vector<8x48xf32>
    %150 = arith.addf %145, %149 : vector<8x48xf32>
    %c2_31 = arith.constant 2 : index
    %151 = memref.load %arg6[%c2_31] : memref<3xf32, #tpu.memory_space<smem>>
    %152 = vector.broadcast %151 : f32 to vector<8x48xf32>
    %153 = arith.addf %150, %152 : vector<8x48xf32>
    %cst_32 = arith.constant 0.000000e+00 : f32
    %154 = vector.broadcast %cst_32 : f32 to vector<8x48xf32>
    %155 = arith.maximumf %153, %154 : vector<8x48xf32>
    %156 = vector.extract_strided_slice %155 {offsets = [0, 8], sizes = [8, 32], strides = [1, 1]} : vector<8x48xf32> to vector<8x32xf32>
    %157 = arith.addf %156, %111 : vector<8x32xf32>
    %cst_33 = arith.constant 0.000000e+00 : f32
    %158 = vector.broadcast %cst_33 : f32 to vector<8x32xf32>
    %159 = arith.maximumf %157, %158 : vector<8x32xf32>
    %160 = vector.extract_strided_slice %159 {offsets = [0, 31], sizes = [8, 1], strides = [1, 1]} : vector<8x32xf32> to vector<8x1xf32>
    %c0_34 = arith.constant 0 : index
    %161 = memref.load %arg16[%c0_34] : memref<5xf32, #tpu.memory_space<smem>>
    %162 = vector.broadcast %161 : f32 to vector<8x1xf32>
    %163 = arith.mulf %160, %162 : vector<8x1xf32>
    %164 = arith.addf %15, %163 : vector<8x1xf32>
    %165 = vector.extract_strided_slice %0 {offsets = [0, 28], sizes = [8, 4], strides = [1, 1]} : vector<8x32xf32> to vector<8x4xf32>
    %166 = vector.extract_strided_slice %0 {offsets = [0, 0], sizes = [8, 4], strides = [1, 1]} : vector<8x32xf32> to vector<8x4xf32>
    %167 = tpu.concatenate %165, %0, %166 in 1 : vector<8x4xf32>, vector<8x32xf32>, vector<8x4xf32> -> vector<8x40xf32>
    %c0_35 = arith.constant 0 : index
    %168 = memref.load %arg7[%c0_35] : memref<15xf32, #tpu.memory_space<smem>>
    %169 = vector.extract_strided_slice %167 {offsets = [0, 0], sizes = [8, 36], strides = [1, 1]} : vector<8x40xf32> to vector<8x36xf32>
    %170 = vector.broadcast %168 : f32 to vector<8x36xf32>
    %171 = arith.mulf %170, %169 : vector<8x36xf32>
    %c1_36 = arith.constant 1 : index
    %172 = memref.load %arg7[%c1_36] : memref<15xf32, #tpu.memory_space<smem>>
    %173 = vector.extract_strided_slice %167 {offsets = [0, 1], sizes = [8, 36], strides = [1, 1]} : vector<8x40xf32> to vector<8x36xf32>
    %174 = vector.broadcast %172 : f32 to vector<8x36xf32>
    %175 = arith.mulf %174, %173 : vector<8x36xf32>
    %176 = arith.addf %171, %175 : vector<8x36xf32>
    %c2_37 = arith.constant 2 : index
    %177 = memref.load %arg7[%c2_37] : memref<15xf32, #tpu.memory_space<smem>>
    %178 = vector.extract_strided_slice %167 {offsets = [0, 2], sizes = [8, 36], strides = [1, 1]} : vector<8x40xf32> to vector<8x36xf32>
    %179 = vector.broadcast %177 : f32 to vector<8x36xf32>
    %180 = arith.mulf %179, %178 : vector<8x36xf32>
    %181 = arith.addf %176, %180 : vector<8x36xf32>
    %c3_38 = arith.constant 3 : index
    %182 = memref.load %arg7[%c3_38] : memref<15xf32, #tpu.memory_space<smem>>
    %183 = vector.extract_strided_slice %167 {offsets = [0, 3], sizes = [8, 36], strides = [1, 1]} : vector<8x40xf32> to vector<8x36xf32>
    %184 = vector.broadcast %182 : f32 to vector<8x36xf32>
    %185 = arith.mulf %184, %183 : vector<8x36xf32>
    %186 = arith.addf %181, %185 : vector<8x36xf32>
    %c4_39 = arith.constant 4 : index
    %187 = memref.load %arg7[%c4_39] : memref<15xf32, #tpu.memory_space<smem>>
    %188 = vector.extract_strided_slice %167 {offsets = [0, 4], sizes = [8, 36], strides = [1, 1]} : vector<8x40xf32> to vector<8x36xf32>
    %189 = vector.broadcast %187 : f32 to vector<8x36xf32>
    %190 = arith.mulf %189, %188 : vector<8x36xf32>
    %191 = arith.addf %186, %190 : vector<8x36xf32>
    %c0_40 = arith.constant 0 : index
    %192 = memref.load %arg8[%c0_40] : memref<3xf32, #tpu.memory_space<smem>>
    %193 = vector.broadcast %192 : f32 to vector<8x36xf32>
    %194 = arith.addf %191, %193 : vector<8x36xf32>
    %cst_41 = arith.constant 0.000000e+00 : f32
    %195 = vector.broadcast %cst_41 : f32 to vector<8x36xf32>
    %196 = arith.maximumf %194, %195 : vector<8x36xf32>
    %197 = vector.extract_strided_slice %196 {offsets = [0, 32], sizes = [8, 4], strides = [1, 1]} : vector<8x36xf32> to vector<8x4xf32>
    %198 = vector.extract_strided_slice %196 {offsets = [0, 0], sizes = [8, 4], strides = [1, 1]} : vector<8x36xf32> to vector<8x4xf32>
    %199 = tpu.concatenate %197, %196, %198 in 1 : vector<8x4xf32>, vector<8x36xf32>, vector<8x4xf32> -> vector<8x44xf32>
    %c0_42 = arith.constant 0 : index
    %200 = memref.load %arg9[%c0_42] : memref<15xf32, #tpu.memory_space<smem>>
    %201 = vector.extract_strided_slice %199 {offsets = [0, 0], sizes = [8, 40], strides = [1, 1]} : vector<8x44xf32> to vector<8x40xf32>
    %202 = vector.broadcast %200 : f32 to vector<8x40xf32>
    %203 = arith.mulf %202, %201 : vector<8x40xf32>
    %c1_43 = arith.constant 1 : index
    %204 = memref.load %arg9[%c1_43] : memref<15xf32, #tpu.memory_space<smem>>
    %205 = vector.extract_strided_slice %199 {offsets = [0, 1], sizes = [8, 40], strides = [1, 1]} : vector<8x44xf32> to vector<8x40xf32>
    %206 = vector.broadcast %204 : f32 to vector<8x40xf32>
    %207 = arith.mulf %206, %205 : vector<8x40xf32>
    %208 = arith.addf %203, %207 : vector<8x40xf32>
    %c2_44 = arith.constant 2 : index
    %209 = memref.load %arg9[%c2_44] : memref<15xf32, #tpu.memory_space<smem>>
    %210 = vector.extract_strided_slice %199 {offsets = [0, 2], sizes = [8, 40], strides = [1, 1]} : vector<8x44xf32> to vector<8x40xf32>
    %211 = vector.broadcast %209 : f32 to vector<8x40xf32>
    %212 = arith.mulf %211, %210 : vector<8x40xf32>
    %213 = arith.addf %208, %212 : vector<8x40xf32>
    %c3_45 = arith.constant 3 : index
    %214 = memref.load %arg9[%c3_45] : memref<15xf32, #tpu.memory_space<smem>>
    %215 = vector.extract_strided_slice %199 {offsets = [0, 3], sizes = [8, 40], strides = [1, 1]} : vector<8x44xf32> to vector<8x40xf32>
    %216 = vector.broadcast %214 : f32 to vector<8x40xf32>
    %217 = arith.mulf %216, %215 : vector<8x40xf32>
    %218 = arith.addf %213, %217 : vector<8x40xf32>
    %c4_46 = arith.constant 4 : index
    %219 = memref.load %arg9[%c4_46] : memref<15xf32, #tpu.memory_space<smem>>
    %220 = vector.extract_strided_slice %199 {offsets = [0, 4], sizes = [8, 40], strides = [1, 1]} : vector<8x44xf32> to vector<8x40xf32>
    %221 = vector.broadcast %219 : f32 to vector<8x40xf32>
    %222 = arith.mulf %221, %220 : vector<8x40xf32>
    %223 = arith.addf %218, %222 : vector<8x40xf32>
    %c0_47 = arith.constant 0 : index
    %224 = memref.load %arg10[%c0_47] : memref<3xf32, #tpu.memory_space<smem>>
    %225 = vector.broadcast %224 : f32 to vector<8x40xf32>
    %226 = arith.addf %223, %225 : vector<8x40xf32>
    %cst_48 = arith.constant 0.000000e+00 : f32
    %227 = vector.broadcast %cst_48 : f32 to vector<8x40xf32>
    %228 = arith.maximumf %226, %227 : vector<8x40xf32>
    %229 = vector.extract_strided_slice %228 {offsets = [0, 4], sizes = [8, 32], strides = [1, 1]} : vector<8x40xf32> to vector<8x32xf32>
    %230 = arith.addf %229, %0 : vector<8x32xf32>
    %cst_49 = arith.constant 0.000000e+00 : f32
    %231 = vector.broadcast %cst_49 : f32 to vector<8x32xf32>
    %232 = arith.maximumf %230, %231 : vector<8x32xf32>
    %233 = vector.extract_strided_slice %232 {offsets = [0, 24], sizes = [8, 8], strides = [1, 1]} : vector<8x32xf32> to vector<8x8xf32>
    %234 = vector.extract_strided_slice %232 {offsets = [0, 0], sizes = [8, 8], strides = [1, 1]} : vector<8x32xf32> to vector<8x8xf32>
    %235 = tpu.concatenate %233, %232, %234 in 1 : vector<8x8xf32>, vector<8x32xf32>, vector<8x8xf32> -> vector<8x48xf32>
    %c5_50 = arith.constant 5 : index
    %236 = memref.load %arg7[%c5_50] : memref<15xf32, #tpu.memory_space<smem>>
    %237 = vector.extract_strided_slice %235 {offsets = [0, 0], sizes = [8, 40], strides = [1, 1]} : vector<8x48xf32> to vector<8x40xf32>
    %238 = vector.broadcast %236 : f32 to vector<8x40xf32>
    %239 = arith.mulf %238, %237 : vector<8x40xf32>
    %c6_51 = arith.constant 6 : index
    %240 = memref.load %arg7[%c6_51] : memref<15xf32, #tpu.memory_space<smem>>
    %241 = vector.extract_strided_slice %235 {offsets = [0, 2], sizes = [8, 40], strides = [1, 1]} : vector<8x48xf32> to vector<8x40xf32>
    %242 = vector.broadcast %240 : f32 to vector<8x40xf32>
    %243 = arith.mulf %242, %241 : vector<8x40xf32>
    %244 = arith.addf %239, %243 : vector<8x40xf32>
    %c7_52 = arith.constant 7 : index
    %245 = memref.load %arg7[%c7_52] : memref<15xf32, #tpu.memory_space<smem>>
    %246 = vector.extract_strided_slice %235 {offsets = [0, 4], sizes = [8, 40], strides = [1, 1]} : vector<8x48xf32> to vector<8x40xf32>
    %247 = vector.broadcast %245 : f32 to vector<8x40xf32>
    %248 = arith.mulf %247, %246 : vector<8x40xf32>
    %249 = arith.addf %244, %248 : vector<8x40xf32>
    %c8_53 = arith.constant 8 : index
    %250 = memref.load %arg7[%c8_53] : memref<15xf32, #tpu.memory_space<smem>>
    %251 = vector.extract_strided_slice %235 {offsets = [0, 6], sizes = [8, 40], strides = [1, 1]} : vector<8x48xf32> to vector<8x40xf32>
    %252 = vector.broadcast %250 : f32 to vector<8x40xf32>
    %253 = arith.mulf %252, %251 : vector<8x40xf32>
    %254 = arith.addf %249, %253 : vector<8x40xf32>
    %c9 = arith.constant 9 : index
    %255 = memref.load %arg7[%c9] : memref<15xf32, #tpu.memory_space<smem>>
    %256 = vector.extract_strided_slice %235 {offsets = [0, 8], sizes = [8, 40], strides = [1, 1]} : vector<8x48xf32> to vector<8x40xf32>
    %257 = vector.broadcast %255 : f32 to vector<8x40xf32>
    %258 = arith.mulf %257, %256 : vector<8x40xf32>
    %259 = arith.addf %254, %258 : vector<8x40xf32>
    %c1_54 = arith.constant 1 : index
    %260 = memref.load %arg8[%c1_54] : memref<3xf32, #tpu.memory_space<smem>>
    %261 = vector.broadcast %260 : f32 to vector<8x40xf32>
    %262 = arith.addf %259, %261 : vector<8x40xf32>
    %cst_55 = arith.constant 0.000000e+00 : f32
    %263 = vector.broadcast %cst_55 : f32 to vector<8x40xf32>
    %264 = arith.maximumf %262, %263 : vector<8x40xf32>
    %265 = vector.extract_strided_slice %264 {offsets = [0, 32], sizes = [8, 8], strides = [1, 1]} : vector<8x40xf32> to vector<8x8xf32>
    %266 = vector.extract_strided_slice %264 {offsets = [0, 0], sizes = [8, 8], strides = [1, 1]} : vector<8x40xf32> to vector<8x8xf32>
    %267 = tpu.concatenate %265, %264, %266 in 1 : vector<8x8xf32>, vector<8x40xf32>, vector<8x8xf32> -> vector<8x56xf32>
    %c5_56 = arith.constant 5 : index
    %268 = memref.load %arg9[%c5_56] : memref<15xf32, #tpu.memory_space<smem>>
    %269 = vector.extract_strided_slice %267 {offsets = [0, 0], sizes = [8, 48], strides = [1, 1]} : vector<8x56xf32> to vector<8x48xf32>
    %270 = vector.broadcast %268 : f32 to vector<8x48xf32>
    %271 = arith.mulf %270, %269 : vector<8x48xf32>
    %c6_57 = arith.constant 6 : index
    %272 = memref.load %arg9[%c6_57] : memref<15xf32, #tpu.memory_space<smem>>
    %273 = vector.extract_strided_slice %267 {offsets = [0, 2], sizes = [8, 48], strides = [1, 1]} : vector<8x56xf32> to vector<8x48xf32>
    %274 = vector.broadcast %272 : f32 to vector<8x48xf32>
    %275 = arith.mulf %274, %273 : vector<8x48xf32>
    %276 = arith.addf %271, %275 : vector<8x48xf32>
    %c7_58 = arith.constant 7 : index
    %277 = memref.load %arg9[%c7_58] : memref<15xf32, #tpu.memory_space<smem>>
    %278 = vector.extract_strided_slice %267 {offsets = [0, 4], sizes = [8, 48], strides = [1, 1]} : vector<8x56xf32> to vector<8x48xf32>
    %279 = vector.broadcast %277 : f32 to vector<8x48xf32>
    %280 = arith.mulf %279, %278 : vector<8x48xf32>
    %281 = arith.addf %276, %280 : vector<8x48xf32>
    %c8_59 = arith.constant 8 : index
    %282 = memref.load %arg9[%c8_59] : memref<15xf32, #tpu.memory_space<smem>>
    %283 = vector.extract_strided_slice %267 {offsets = [0, 6], sizes = [8, 48], strides = [1, 1]} : vector<8x56xf32> to vector<8x48xf32>
    %284 = vector.broadcast %282 : f32 to vector<8x48xf32>
    %285 = arith.mulf %284, %283 : vector<8x48xf32>
    %286 = arith.addf %281, %285 : vector<8x48xf32>
    %c9_60 = arith.constant 9 : index
    %287 = memref.load %arg9[%c9_60] : memref<15xf32, #tpu.memory_space<smem>>
    %288 = vector.extract_strided_slice %267 {offsets = [0, 8], sizes = [8, 48], strides = [1, 1]} : vector<8x56xf32> to vector<8x48xf32>
    %289 = vector.broadcast %287 : f32 to vector<8x48xf32>
    %290 = arith.mulf %289, %288 : vector<8x48xf32>
    %291 = arith.addf %286, %290 : vector<8x48xf32>
    %c1_61 = arith.constant 1 : index
    %292 = memref.load %arg10[%c1_61] : memref<3xf32, #tpu.memory_space<smem>>
    %293 = vector.broadcast %292 : f32 to vector<8x48xf32>
    %294 = arith.addf %291, %293 : vector<8x48xf32>
    %cst_62 = arith.constant 0.000000e+00 : f32
    %295 = vector.broadcast %cst_62 : f32 to vector<8x48xf32>
    %296 = arith.maximumf %294, %295 : vector<8x48xf32>
    %297 = vector.extract_strided_slice %296 {offsets = [0, 8], sizes = [8, 32], strides = [1, 1]} : vector<8x48xf32> to vector<8x32xf32>
    %298 = arith.addf %297, %232 : vector<8x32xf32>
    %cst_63 = arith.constant 0.000000e+00 : f32
    %299 = vector.broadcast %cst_63 : f32 to vector<8x32xf32>
    %300 = arith.maximumf %298, %299 : vector<8x32xf32>
    %301 = vector.extract_strided_slice %300 {offsets = [0, 16], sizes = [8, 16], strides = [1, 1]} : vector<8x32xf32> to vector<8x16xf32>
    %302 = vector.extract_strided_slice %300 {offsets = [0, 0], sizes = [8, 16], strides = [1, 1]} : vector<8x32xf32> to vector<8x16xf32>
    %303 = tpu.concatenate %301, %300, %302 in 1 : vector<8x16xf32>, vector<8x32xf32>, vector<8x16xf32> -> vector<8x64xf32>
    %c10 = arith.constant 10 : index
    %304 = memref.load %arg7[%c10] : memref<15xf32, #tpu.memory_space<smem>>
    %305 = vector.extract_strided_slice %303 {offsets = [0, 0], sizes = [8, 48], strides = [1, 1]} : vector<8x64xf32> to vector<8x48xf32>
    %306 = vector.broadcast %304 : f32 to vector<8x48xf32>
    %307 = arith.mulf %306, %305 : vector<8x48xf32>
    %c11 = arith.constant 11 : index
    %308 = memref.load %arg7[%c11] : memref<15xf32, #tpu.memory_space<smem>>
    %309 = vector.extract_strided_slice %303 {offsets = [0, 4], sizes = [8, 48], strides = [1, 1]} : vector<8x64xf32> to vector<8x48xf32>
    %310 = vector.broadcast %308 : f32 to vector<8x48xf32>
    %311 = arith.mulf %310, %309 : vector<8x48xf32>
    %312 = arith.addf %307, %311 : vector<8x48xf32>
    %c12 = arith.constant 12 : index
    %313 = memref.load %arg7[%c12] : memref<15xf32, #tpu.memory_space<smem>>
    %314 = vector.extract_strided_slice %303 {offsets = [0, 8], sizes = [8, 48], strides = [1, 1]} : vector<8x64xf32> to vector<8x48xf32>
    %315 = vector.broadcast %313 : f32 to vector<8x48xf32>
    %316 = arith.mulf %315, %314 : vector<8x48xf32>
    %317 = arith.addf %312, %316 : vector<8x48xf32>
    %c13 = arith.constant 13 : index
    %318 = memref.load %arg7[%c13] : memref<15xf32, #tpu.memory_space<smem>>
    %319 = vector.extract_strided_slice %303 {offsets = [0, 12], sizes = [8, 48], strides = [1, 1]} : vector<8x64xf32> to vector<8x48xf32>
    %320 = vector.broadcast %318 : f32 to vector<8x48xf32>
    %321 = arith.mulf %320, %319 : vector<8x48xf32>
    %322 = arith.addf %317, %321 : vector<8x48xf32>
    %c14 = arith.constant 14 : index
    %323 = memref.load %arg7[%c14] : memref<15xf32, #tpu.memory_space<smem>>
    %324 = vector.extract_strided_slice %303 {offsets = [0, 16], sizes = [8, 48], strides = [1, 1]} : vector<8x64xf32> to vector<8x48xf32>
    %325 = vector.broadcast %323 : f32 to vector<8x48xf32>
    %326 = arith.mulf %325, %324 : vector<8x48xf32>
    %327 = arith.addf %322, %326 : vector<8x48xf32>
    %c2_64 = arith.constant 2 : index
    %328 = memref.load %arg8[%c2_64] : memref<3xf32, #tpu.memory_space<smem>>
    %329 = vector.broadcast %328 : f32 to vector<8x48xf32>
    %330 = arith.addf %327, %329 : vector<8x48xf32>
    %cst_65 = arith.constant 0.000000e+00 : f32
    %331 = vector.broadcast %cst_65 : f32 to vector<8x48xf32>
    %332 = arith.maximumf %330, %331 : vector<8x48xf32>
    %333 = vector.extract_strided_slice %332 {offsets = [0, 32], sizes = [8, 16], strides = [1, 1]} : vector<8x48xf32> to vector<8x16xf32>
    %334 = vector.extract_strided_slice %332 {offsets = [0, 0], sizes = [8, 16], strides = [1, 1]} : vector<8x48xf32> to vector<8x16xf32>
    %335 = tpu.concatenate %333, %332, %334 in 1 : vector<8x16xf32>, vector<8x48xf32>, vector<8x16xf32> -> vector<8x80xf32>
    %c10_66 = arith.constant 10 : index
    %336 = memref.load %arg9[%c10_66] : memref<15xf32, #tpu.memory_space<smem>>
    %337 = vector.extract_strided_slice %335 {offsets = [0, 0], sizes = [8, 64], strides = [1, 1]} : vector<8x80xf32> to vector<8x64xf32>
    %338 = vector.broadcast %336 : f32 to vector<8x64xf32>
    %339 = arith.mulf %338, %337 : vector<8x64xf32>
    %c11_67 = arith.constant 11 : index
    %340 = memref.load %arg9[%c11_67] : memref<15xf32, #tpu.memory_space<smem>>
    %341 = vector.extract_strided_slice %335 {offsets = [0, 4], sizes = [8, 64], strides = [1, 1]} : vector<8x80xf32> to vector<8x64xf32>
    %342 = vector.broadcast %340 : f32 to vector<8x64xf32>
    %343 = arith.mulf %342, %341 : vector<8x64xf32>
    %344 = arith.addf %339, %343 : vector<8x64xf32>
    %c12_68 = arith.constant 12 : index
    %345 = memref.load %arg9[%c12_68] : memref<15xf32, #tpu.memory_space<smem>>
    %346 = vector.extract_strided_slice %335 {offsets = [0, 8], sizes = [8, 64], strides = [1, 1]} : vector<8x80xf32> to vector<8x64xf32>
    %347 = vector.broadcast %345 : f32 to vector<8x64xf32>
    %348 = arith.mulf %347, %346 : vector<8x64xf32>
    %349 = arith.addf %344, %348 : vector<8x64xf32>
    %c13_69 = arith.constant 13 : index
    %350 = memref.load %arg9[%c13_69] : memref<15xf32, #tpu.memory_space<smem>>
    %351 = vector.extract_strided_slice %335 {offsets = [0, 12], sizes = [8, 64], strides = [1, 1]} : vector<8x80xf32> to vector<8x64xf32>
    %352 = vector.broadcast %350 : f32 to vector<8x64xf32>
    %353 = arith.mulf %352, %351 : vector<8x64xf32>
    %354 = arith.addf %349, %353 : vector<8x64xf32>
    %c14_70 = arith.constant 14 : index
    %355 = memref.load %arg9[%c14_70] : memref<15xf32, #tpu.memory_space<smem>>
    %356 = vector.extract_strided_slice %335 {offsets = [0, 16], sizes = [8, 64], strides = [1, 1]} : vector<8x80xf32> to vector<8x64xf32>
    %357 = vector.broadcast %355 : f32 to vector<8x64xf32>
    %358 = arith.mulf %357, %356 : vector<8x64xf32>
    %359 = arith.addf %354, %358 : vector<8x64xf32>
    %c2_71 = arith.constant 2 : index
    %360 = memref.load %arg10[%c2_71] : memref<3xf32, #tpu.memory_space<smem>>
    %361 = vector.broadcast %360 : f32 to vector<8x64xf32>
    %362 = arith.addf %359, %361 : vector<8x64xf32>
    %cst_72 = arith.constant 0.000000e+00 : f32
    %363 = vector.broadcast %cst_72 : f32 to vector<8x64xf32>
    %364 = arith.maximumf %362, %363 : vector<8x64xf32>
    %365 = vector.extract_strided_slice %364 {offsets = [0, 16], sizes = [8, 32], strides = [1, 1]} : vector<8x64xf32> to vector<8x32xf32>
    %366 = arith.addf %365, %300 : vector<8x32xf32>
    %cst_73 = arith.constant 0.000000e+00 : f32
    %367 = vector.broadcast %cst_73 : f32 to vector<8x32xf32>
    %368 = arith.maximumf %366, %367 : vector<8x32xf32>
    %369 = vector.extract_strided_slice %368 {offsets = [0, 31], sizes = [8, 1], strides = [1, 1]} : vector<8x32xf32> to vector<8x1xf32>
    %c1_74 = arith.constant 1 : index
    %370 = memref.load %arg16[%c1_74] : memref<5xf32, #tpu.memory_space<smem>>
    %371 = vector.broadcast %370 : f32 to vector<8x1xf32>
    %372 = arith.mulf %369, %371 : vector<8x1xf32>
    %373 = arith.addf %164, %372 : vector<8x1xf32>
    %374 = vector.extract_strided_slice %0 {offsets = [0, 26], sizes = [8, 6], strides = [1, 1]} : vector<8x32xf32> to vector<8x6xf32>
    %375 = vector.extract_strided_slice %0 {offsets = [0, 0], sizes = [8, 6], strides = [1, 1]} : vector<8x32xf32> to vector<8x6xf32>
    %376 = tpu.concatenate %374, %0, %375 in 1 : vector<8x6xf32>, vector<8x32xf32>, vector<8x6xf32> -> vector<8x44xf32>
    %c0_75 = arith.constant 0 : index
    %377 = memref.load %arg11[%c0_75] : memref<21xf32, #tpu.memory_space<smem>>
    %378 = vector.extract_strided_slice %376 {offsets = [0, 0], sizes = [8, 38], strides = [1, 1]} : vector<8x44xf32> to vector<8x38xf32>
    %379 = vector.broadcast %377 : f32 to vector<8x38xf32>
    %380 = arith.mulf %379, %378 : vector<8x38xf32>
    %c1_76 = arith.constant 1 : index
    %381 = memref.load %arg11[%c1_76] : memref<21xf32, #tpu.memory_space<smem>>
    %382 = vector.extract_strided_slice %376 {offsets = [0, 1], sizes = [8, 38], strides = [1, 1]} : vector<8x44xf32> to vector<8x38xf32>
    %383 = vector.broadcast %381 : f32 to vector<8x38xf32>
    %384 = arith.mulf %383, %382 : vector<8x38xf32>
    %385 = arith.addf %380, %384 : vector<8x38xf32>
    %c2_77 = arith.constant 2 : index
    %386 = memref.load %arg11[%c2_77] : memref<21xf32, #tpu.memory_space<smem>>
    %387 = vector.extract_strided_slice %376 {offsets = [0, 2], sizes = [8, 38], strides = [1, 1]} : vector<8x44xf32> to vector<8x38xf32>
    %388 = vector.broadcast %386 : f32 to vector<8x38xf32>
    %389 = arith.mulf %388, %387 : vector<8x38xf32>
    %390 = arith.addf %385, %389 : vector<8x38xf32>
    %c3_78 = arith.constant 3 : index
    %391 = memref.load %arg11[%c3_78] : memref<21xf32, #tpu.memory_space<smem>>
    %392 = vector.extract_strided_slice %376 {offsets = [0, 3], sizes = [8, 38], strides = [1, 1]} : vector<8x44xf32> to vector<8x38xf32>
    %393 = vector.broadcast %391 : f32 to vector<8x38xf32>
    %394 = arith.mulf %393, %392 : vector<8x38xf32>
    %395 = arith.addf %390, %394 : vector<8x38xf32>
    %c4_79 = arith.constant 4 : index
    %396 = memref.load %arg11[%c4_79] : memref<21xf32, #tpu.memory_space<smem>>
    %397 = vector.extract_strided_slice %376 {offsets = [0, 4], sizes = [8, 38], strides = [1, 1]} : vector<8x44xf32> to vector<8x38xf32>
    %398 = vector.broadcast %396 : f32 to vector<8x38xf32>
    %399 = arith.mulf %398, %397 : vector<8x38xf32>
    %400 = arith.addf %395, %399 : vector<8x38xf32>
    %c5_80 = arith.constant 5 : index
    %401 = memref.load %arg11[%c5_80] : memref<21xf32, #tpu.memory_space<smem>>
    %402 = vector.extract_strided_slice %376 {offsets = [0, 5], sizes = [8, 38], strides = [1, 1]} : vector<8x44xf32> to vector<8x38xf32>
    %403 = vector.broadcast %401 : f32 to vector<8x38xf32>
    %404 = arith.mulf %403, %402 : vector<8x38xf32>
    %405 = arith.addf %400, %404 : vector<8x38xf32>
    %c6_81 = arith.constant 6 : index
    %406 = memref.load %arg11[%c6_81] : memref<21xf32, #tpu.memory_space<smem>>
    %407 = vector.extract_strided_slice %376 {offsets = [0, 6], sizes = [8, 38], strides = [1, 1]} : vector<8x44xf32> to vector<8x38xf32>
    %408 = vector.broadcast %406 : f32 to vector<8x38xf32>
    %409 = arith.mulf %408, %407 : vector<8x38xf32>
    %410 = arith.addf %405, %409 : vector<8x38xf32>
    %c0_82 = arith.constant 0 : index
    %411 = memref.load %arg12[%c0_82] : memref<3xf32, #tpu.memory_space<smem>>
    %412 = vector.broadcast %411 : f32 to vector<8x38xf32>
    %413 = arith.addf %410, %412 : vector<8x38xf32>
    %cst_83 = arith.constant 0.000000e+00 : f32
    %414 = vector.broadcast %cst_83 : f32 to vector<8x38xf32>
    %415 = arith.maximumf %413, %414 : vector<8x38xf32>
    %416 = vector.extract_strided_slice %415 {offsets = [0, 32], sizes = [8, 6], strides = [1, 1]} : vector<8x38xf32> to vector<8x6xf32>
    %417 = vector.extract_strided_slice %415 {offsets = [0, 0], sizes = [8, 6], strides = [1, 1]} : vector<8x38xf32> to vector<8x6xf32>
    %418 = tpu.concatenate %416, %415, %417 in 1 : vector<8x6xf32>, vector<8x38xf32>, vector<8x6xf32> -> vector<8x50xf32>
    %c0_84 = arith.constant 0 : index
    %419 = memref.load %arg13[%c0_84] : memref<21xf32, #tpu.memory_space<smem>>
    %420 = vector.extract_strided_slice %418 {offsets = [0, 0], sizes = [8, 44], strides = [1, 1]} : vector<8x50xf32> to vector<8x44xf32>
    %421 = vector.broadcast %419 : f32 to vector<8x44xf32>
    %422 = arith.mulf %421, %420 : vector<8x44xf32>
    %c1_85 = arith.constant 1 : index
    %423 = memref.load %arg13[%c1_85] : memref<21xf32, #tpu.memory_space<smem>>
    %424 = vector.extract_strided_slice %418 {offsets = [0, 1], sizes = [8, 44], strides = [1, 1]} : vector<8x50xf32> to vector<8x44xf32>
    %425 = vector.broadcast %423 : f32 to vector<8x44xf32>
    %426 = arith.mulf %425, %424 : vector<8x44xf32>
    %427 = arith.addf %422, %426 : vector<8x44xf32>
    %c2_86 = arith.constant 2 : index
    %428 = memref.load %arg13[%c2_86] : memref<21xf32, #tpu.memory_space<smem>>
    %429 = vector.extract_strided_slice %418 {offsets = [0, 2], sizes = [8, 44], strides = [1, 1]} : vector<8x50xf32> to vector<8x44xf32>
    %430 = vector.broadcast %428 : f32 to vector<8x44xf32>
    %431 = arith.mulf %430, %429 : vector<8x44xf32>
    %432 = arith.addf %427, %431 : vector<8x44xf32>
    %c3_87 = arith.constant 3 : index
    %433 = memref.load %arg13[%c3_87] : memref<21xf32, #tpu.memory_space<smem>>
    %434 = vector.extract_strided_slice %418 {offsets = [0, 3], sizes = [8, 44], strides = [1, 1]} : vector<8x50xf32> to vector<8x44xf32>
    %435 = vector.broadcast %433 : f32 to vector<8x44xf32>
    %436 = arith.mulf %435, %434 : vector<8x44xf32>
    %437 = arith.addf %432, %436 : vector<8x44xf32>
    %c4_88 = arith.constant 4 : index
    %438 = memref.load %arg13[%c4_88] : memref<21xf32, #tpu.memory_space<smem>>
    %439 = vector.extract_strided_slice %418 {offsets = [0, 4], sizes = [8, 44], strides = [1, 1]} : vector<8x50xf32> to vector<8x44xf32>
    %440 = vector.broadcast %438 : f32 to vector<8x44xf32>
    %441 = arith.mulf %440, %439 : vector<8x44xf32>
    %442 = arith.addf %437, %441 : vector<8x44xf32>
    %c5_89 = arith.constant 5 : index
    %443 = memref.load %arg13[%c5_89] : memref<21xf32, #tpu.memory_space<smem>>
    %444 = vector.extract_strided_slice %418 {offsets = [0, 5], sizes = [8, 44], strides = [1, 1]} : vector<8x50xf32> to vector<8x44xf32>
    %445 = vector.broadcast %443 : f32 to vector<8x44xf32>
    %446 = arith.mulf %445, %444 : vector<8x44xf32>
    %447 = arith.addf %442, %446 : vector<8x44xf32>
    %c6_90 = arith.constant 6 : index
    %448 = memref.load %arg13[%c6_90] : memref<21xf32, #tpu.memory_space<smem>>
    %449 = vector.extract_strided_slice %418 {offsets = [0, 6], sizes = [8, 44], strides = [1, 1]} : vector<8x50xf32> to vector<8x44xf32>
    %450 = vector.broadcast %448 : f32 to vector<8x44xf32>
    %451 = arith.mulf %450, %449 : vector<8x44xf32>
    %452 = arith.addf %447, %451 : vector<8x44xf32>
    %c0_91 = arith.constant 0 : index
    %453 = memref.load %arg14[%c0_91] : memref<3xf32, #tpu.memory_space<smem>>
    %454 = vector.broadcast %453 : f32 to vector<8x44xf32>
    %455 = arith.addf %452, %454 : vector<8x44xf32>
    %cst_92 = arith.constant 0.000000e+00 : f32
    %456 = vector.broadcast %cst_92 : f32 to vector<8x44xf32>
    %457 = arith.maximumf %455, %456 : vector<8x44xf32>
    %458 = vector.extract_strided_slice %457 {offsets = [0, 6], sizes = [8, 32], strides = [1, 1]} : vector<8x44xf32> to vector<8x32xf32>
    %459 = arith.addf %458, %0 : vector<8x32xf32>
    %cst_93 = arith.constant 0.000000e+00 : f32
    %460 = vector.broadcast %cst_93 : f32 to vector<8x32xf32>
    %461 = arith.maximumf %459, %460 : vector<8x32xf32>
    %462 = vector.extract_strided_slice %461 {offsets = [0, 20], sizes = [8, 12], strides = [1, 1]} : vector<8x32xf32> to vector<8x12xf32>
    %463 = vector.extract_strided_slice %461 {offsets = [0, 0], sizes = [8, 12], strides = [1, 1]} : vector<8x32xf32> to vector<8x12xf32>
    %464 = tpu.concatenate %462, %461, %463 in 1 : vector<8x12xf32>, vector<8x32xf32>, vector<8x12xf32> -> vector<8x56xf32>
    %c7_94 = arith.constant 7 : index
    %465 = memref.load %arg11[%c7_94] : memref<21xf32, #tpu.memory_space<smem>>
    %466 = vector.extract_strided_slice %464 {offsets = [0, 0], sizes = [8, 44], strides = [1, 1]} : vector<8x56xf32> to vector<8x44xf32>
    %467 = vector.broadcast %465 : f32 to vector<8x44xf32>
    %468 = arith.mulf %467, %466 : vector<8x44xf32>
    %c8_95 = arith.constant 8 : index
    %469 = memref.load %arg11[%c8_95] : memref<21xf32, #tpu.memory_space<smem>>
    %470 = vector.extract_strided_slice %464 {offsets = [0, 2], sizes = [8, 44], strides = [1, 1]} : vector<8x56xf32> to vector<8x44xf32>
    %471 = vector.broadcast %469 : f32 to vector<8x44xf32>
    %472 = arith.mulf %471, %470 : vector<8x44xf32>
    %473 = arith.addf %468, %472 : vector<8x44xf32>
    %c9_96 = arith.constant 9 : index
    %474 = memref.load %arg11[%c9_96] : memref<21xf32, #tpu.memory_space<smem>>
    %475 = vector.extract_strided_slice %464 {offsets = [0, 4], sizes = [8, 44], strides = [1, 1]} : vector<8x56xf32> to vector<8x44xf32>
    %476 = vector.broadcast %474 : f32 to vector<8x44xf32>
    %477 = arith.mulf %476, %475 : vector<8x44xf32>
    %478 = arith.addf %473, %477 : vector<8x44xf32>
    %c10_97 = arith.constant 10 : index
    %479 = memref.load %arg11[%c10_97] : memref<21xf32, #tpu.memory_space<smem>>
    %480 = vector.extract_strided_slice %464 {offsets = [0, 6], sizes = [8, 44], strides = [1, 1]} : vector<8x56xf32> to vector<8x44xf32>
    %481 = vector.broadcast %479 : f32 to vector<8x44xf32>
    %482 = arith.mulf %481, %480 : vector<8x44xf32>
    %483 = arith.addf %478, %482 : vector<8x44xf32>
    %c11_98 = arith.constant 11 : index
    %484 = memref.load %arg11[%c11_98] : memref<21xf32, #tpu.memory_space<smem>>
    %485 = vector.extract_strided_slice %464 {offsets = [0, 8], sizes = [8, 44], strides = [1, 1]} : vector<8x56xf32> to vector<8x44xf32>
    %486 = vector.broadcast %484 : f32 to vector<8x44xf32>
    %487 = arith.mulf %486, %485 : vector<8x44xf32>
    %488 = arith.addf %483, %487 : vector<8x44xf32>
    %c12_99 = arith.constant 12 : index
    %489 = memref.load %arg11[%c12_99] : memref<21xf32, #tpu.memory_space<smem>>
    %490 = vector.extract_strided_slice %464 {offsets = [0, 10], sizes = [8, 44], strides = [1, 1]} : vector<8x56xf32> to vector<8x44xf32>
    %491 = vector.broadcast %489 : f32 to vector<8x44xf32>
    %492 = arith.mulf %491, %490 : vector<8x44xf32>
    %493 = arith.addf %488, %492 : vector<8x44xf32>
    %c13_100 = arith.constant 13 : index
    %494 = memref.load %arg11[%c13_100] : memref<21xf32, #tpu.memory_space<smem>>
    %495 = vector.extract_strided_slice %464 {offsets = [0, 12], sizes = [8, 44], strides = [1, 1]} : vector<8x56xf32> to vector<8x44xf32>
    %496 = vector.broadcast %494 : f32 to vector<8x44xf32>
    %497 = arith.mulf %496, %495 : vector<8x44xf32>
    %498 = arith.addf %493, %497 : vector<8x44xf32>
    %c1_101 = arith.constant 1 : index
    %499 = memref.load %arg12[%c1_101] : memref<3xf32, #tpu.memory_space<smem>>
    %500 = vector.broadcast %499 : f32 to vector<8x44xf32>
    %501 = arith.addf %498, %500 : vector<8x44xf32>
    %cst_102 = arith.constant 0.000000e+00 : f32
    %502 = vector.broadcast %cst_102 : f32 to vector<8x44xf32>
    %503 = arith.maximumf %501, %502 : vector<8x44xf32>
    %504 = vector.extract_strided_slice %503 {offsets = [0, 32], sizes = [8, 12], strides = [1, 1]} : vector<8x44xf32> to vector<8x12xf32>
    %505 = vector.extract_strided_slice %503 {offsets = [0, 0], sizes = [8, 12], strides = [1, 1]} : vector<8x44xf32> to vector<8x12xf32>
    %506 = tpu.concatenate %504, %503, %505 in 1 : vector<8x12xf32>, vector<8x44xf32>, vector<8x12xf32> -> vector<8x68xf32>
    %c7_103 = arith.constant 7 : index
    %507 = memref.load %arg13[%c7_103] : memref<21xf32, #tpu.memory_space<smem>>
    %508 = vector.extract_strided_slice %506 {offsets = [0, 0], sizes = [8, 56], strides = [1, 1]} : vector<8x68xf32> to vector<8x56xf32>
    %509 = vector.broadcast %507 : f32 to vector<8x56xf32>
    %510 = arith.mulf %509, %508 : vector<8x56xf32>
    %c8_104 = arith.constant 8 : index
    %511 = memref.load %arg13[%c8_104] : memref<21xf32, #tpu.memory_space<smem>>
    %512 = vector.extract_strided_slice %506 {offsets = [0, 2], sizes = [8, 56], strides = [1, 1]} : vector<8x68xf32> to vector<8x56xf32>
    %513 = vector.broadcast %511 : f32 to vector<8x56xf32>
    %514 = arith.mulf %513, %512 : vector<8x56xf32>
    %515 = arith.addf %510, %514 : vector<8x56xf32>
    %c9_105 = arith.constant 9 : index
    %516 = memref.load %arg13[%c9_105] : memref<21xf32, #tpu.memory_space<smem>>
    %517 = vector.extract_strided_slice %506 {offsets = [0, 4], sizes = [8, 56], strides = [1, 1]} : vector<8x68xf32> to vector<8x56xf32>
    %518 = vector.broadcast %516 : f32 to vector<8x56xf32>
    %519 = arith.mulf %518, %517 : vector<8x56xf32>
    %520 = arith.addf %515, %519 : vector<8x56xf32>
    %c10_106 = arith.constant 10 : index
    %521 = memref.load %arg13[%c10_106] : memref<21xf32, #tpu.memory_space<smem>>
    %522 = vector.extract_strided_slice %506 {offsets = [0, 6], sizes = [8, 56], strides = [1, 1]} : vector<8x68xf32> to vector<8x56xf32>
    %523 = vector.broadcast %521 : f32 to vector<8x56xf32>
    %524 = arith.mulf %523, %522 : vector<8x56xf32>
    %525 = arith.addf %520, %524 : vector<8x56xf32>
    %c11_107 = arith.constant 11 : index
    %526 = memref.load %arg13[%c11_107] : memref<21xf32, #tpu.memory_space<smem>>
    %527 = vector.extract_strided_slice %506 {offsets = [0, 8], sizes = [8, 56], strides = [1, 1]} : vector<8x68xf32> to vector<8x56xf32>
    %528 = vector.broadcast %526 : f32 to vector<8x56xf32>
    %529 = arith.mulf %528, %527 : vector<8x56xf32>
    %530 = arith.addf %525, %529 : vector<8x56xf32>
    %c12_108 = arith.constant 12 : index
    %531 = memref.load %arg13[%c12_108] : memref<21xf32, #tpu.memory_space<smem>>
    %532 = vector.extract_strided_slice %506 {offsets = [0, 10], sizes = [8, 56], strides = [1, 1]} : vector<8x68xf32> to vector<8x56xf32>
    %533 = vector.broadcast %531 : f32 to vector<8x56xf32>
    %534 = arith.mulf %533, %532 : vector<8x56xf32>
    %535 = arith.addf %530, %534 : vector<8x56xf32>
    %c13_109 = arith.constant 13 : index
    %536 = memref.load %arg13[%c13_109] : memref<21xf32, #tpu.memory_space<smem>>
    %537 = vector.extract_strided_slice %506 {offsets = [0, 12], sizes = [8, 56], strides = [1, 1]} : vector<8x68xf32> to vector<8x56xf32>
    %538 = vector.broadcast %536 : f32 to vector<8x56xf32>
    %539 = arith.mulf %538, %537 : vector<8x56xf32>
    %540 = arith.addf %535, %539 : vector<8x56xf32>
    %c1_110 = arith.constant 1 : index
    %541 = memref.load %arg14[%c1_110] : memref<3xf32, #tpu.memory_space<smem>>
    %542 = vector.broadcast %541 : f32 to vector<8x56xf32>
    %543 = arith.addf %540, %542 : vector<8x56xf32>
    %cst_111 = arith.constant 0.000000e+00 : f32
    %544 = vector.broadcast %cst_111 : f32 to vector<8x56xf32>
    %545 = arith.maximumf %543, %544 : vector<8x56xf32>
    %546 = vector.extract_strided_slice %545 {offsets = [0, 12], sizes = [8, 32], strides = [1, 1]} : vector<8x56xf32> to vector<8x32xf32>
    %547 = arith.addf %546, %461 : vector<8x32xf32>
    %cst_112 = arith.constant 0.000000e+00 : f32
    %548 = vector.broadcast %cst_112 : f32 to vector<8x32xf32>
    %549 = arith.maximumf %547, %548 : vector<8x32xf32>
    %550 = vector.extract_strided_slice %549 {offsets = [0, 8], sizes = [8, 24], strides = [1, 1]} : vector<8x32xf32> to vector<8x24xf32>
    %551 = vector.extract_strided_slice %549 {offsets = [0, 0], sizes = [8, 24], strides = [1, 1]} : vector<8x32xf32> to vector<8x24xf32>
    %552 = tpu.concatenate %550, %549, %551 in 1 : vector<8x24xf32>, vector<8x32xf32>, vector<8x24xf32> -> vector<8x80xf32>
    %c14_113 = arith.constant 14 : index
    %553 = memref.load %arg11[%c14_113] : memref<21xf32, #tpu.memory_space<smem>>
    %554 = vector.extract_strided_slice %552 {offsets = [0, 0], sizes = [8, 56], strides = [1, 1]} : vector<8x80xf32> to vector<8x56xf32>
    %555 = vector.broadcast %553 : f32 to vector<8x56xf32>
    %556 = arith.mulf %555, %554 : vector<8x56xf32>
    %c15 = arith.constant 15 : index
    %557 = memref.load %arg11[%c15] : memref<21xf32, #tpu.memory_space<smem>>
    %558 = vector.extract_strided_slice %552 {offsets = [0, 4], sizes = [8, 56], strides = [1, 1]} : vector<8x80xf32> to vector<8x56xf32>
    %559 = vector.broadcast %557 : f32 to vector<8x56xf32>
    %560 = arith.mulf %559, %558 : vector<8x56xf32>
    %561 = arith.addf %556, %560 : vector<8x56xf32>
    %c16 = arith.constant 16 : index
    %562 = memref.load %arg11[%c16] : memref<21xf32, #tpu.memory_space<smem>>
    %563 = vector.extract_strided_slice %552 {offsets = [0, 8], sizes = [8, 56], strides = [1, 1]} : vector<8x80xf32> to vector<8x56xf32>
    %564 = vector.broadcast %562 : f32 to vector<8x56xf32>
    %565 = arith.mulf %564, %563 : vector<8x56xf32>
    %566 = arith.addf %561, %565 : vector<8x56xf32>
    %c17 = arith.constant 17 : index
    %567 = memref.load %arg11[%c17] : memref<21xf32, #tpu.memory_space<smem>>
    %568 = vector.extract_strided_slice %552 {offsets = [0, 12], sizes = [8, 56], strides = [1, 1]} : vector<8x80xf32> to vector<8x56xf32>
    %569 = vector.broadcast %567 : f32 to vector<8x56xf32>
    %570 = arith.mulf %569, %568 : vector<8x56xf32>
    %571 = arith.addf %566, %570 : vector<8x56xf32>
    %c18 = arith.constant 18 : index
    %572 = memref.load %arg11[%c18] : memref<21xf32, #tpu.memory_space<smem>>
    %573 = vector.extract_strided_slice %552 {offsets = [0, 16], sizes = [8, 56], strides = [1, 1]} : vector<8x80xf32> to vector<8x56xf32>
    %574 = vector.broadcast %572 : f32 to vector<8x56xf32>
    %575 = arith.mulf %574, %573 : vector<8x56xf32>
    %576 = arith.addf %571, %575 : vector<8x56xf32>
    %c19 = arith.constant 19 : index
    %577 = memref.load %arg11[%c19] : memref<21xf32, #tpu.memory_space<smem>>
    %578 = vector.extract_strided_slice %552 {offsets = [0, 20], sizes = [8, 56], strides = [1, 1]} : vector<8x80xf32> to vector<8x56xf32>
    %579 = vector.broadcast %577 : f32 to vector<8x56xf32>
    %580 = arith.mulf %579, %578 : vector<8x56xf32>
    %581 = arith.addf %576, %580 : vector<8x56xf32>
    %c20 = arith.constant 20 : index
    %582 = memref.load %arg11[%c20] : memref<21xf32, #tpu.memory_space<smem>>
    %583 = vector.extract_strided_slice %552 {offsets = [0, 24], sizes = [8, 56], strides = [1, 1]} : vector<8x80xf32> to vector<8x56xf32>
    %584 = vector.broadcast %582 : f32 to vector<8x56xf32>
    %585 = arith.mulf %584, %583 : vector<8x56xf32>
    %586 = arith.addf %581, %585 : vector<8x56xf32>
    %c2_114 = arith.constant 2 : index
    %587 = memref.load %arg12[%c2_114] : memref<3xf32, #tpu.memory_space<smem>>
    %588 = vector.broadcast %587 : f32 to vector<8x56xf32>
    %589 = arith.addf %586, %588 : vector<8x56xf32>
    %cst_115 = arith.constant 0.000000e+00 : f32
    %590 = vector.broadcast %cst_115 : f32 to vector<8x56xf32>
    %591 = arith.maximumf %589, %590 : vector<8x56xf32>
    %592 = vector.extract_strided_slice %591 {offsets = [0, 32], sizes = [8, 24], strides = [1, 1]} : vector<8x56xf32> to vector<8x24xf32>
    %593 = vector.extract_strided_slice %591 {offsets = [0, 0], sizes = [8, 24], strides = [1, 1]} : vector<8x56xf32> to vector<8x24xf32>
    %594 = tpu.concatenate %592, %591, %593 in 1 : vector<8x24xf32>, vector<8x56xf32>, vector<8x24xf32> -> vector<8x104xf32>
    %c14_116 = arith.constant 14 : index
    %595 = memref.load %arg13[%c14_116] : memref<21xf32, #tpu.memory_space<smem>>
    %596 = vector.extract_strided_slice %594 {offsets = [0, 0], sizes = [8, 80], strides = [1, 1]} : vector<8x104xf32> to vector<8x80xf32>
    %597 = vector.broadcast %595 : f32 to vector<8x80xf32>
    %598 = arith.mulf %597, %596 : vector<8x80xf32>
    %c15_117 = arith.constant 15 : index
    %599 = memref.load %arg13[%c15_117] : memref<21xf32, #tpu.memory_space<smem>>
    %600 = vector.extract_strided_slice %594 {offsets = [0, 4], sizes = [8, 80], strides = [1, 1]} : vector<8x104xf32> to vector<8x80xf32>
    %601 = vector.broadcast %599 : f32 to vector<8x80xf32>
    %602 = arith.mulf %601, %600 : vector<8x80xf32>
    %603 = arith.addf %598, %602 : vector<8x80xf32>
    %c16_118 = arith.constant 16 : index
    %604 = memref.load %arg13[%c16_118] : memref<21xf32, #tpu.memory_space<smem>>
    %605 = vector.extract_strided_slice %594 {offsets = [0, 8], sizes = [8, 80], strides = [1, 1]} : vector<8x104xf32> to vector<8x80xf32>
    %606 = vector.broadcast %604 : f32 to vector<8x80xf32>
    %607 = arith.mulf %606, %605 : vector<8x80xf32>
    %608 = arith.addf %603, %607 : vector<8x80xf32>
    %c17_119 = arith.constant 17 : index
    %609 = memref.load %arg13[%c17_119] : memref<21xf32, #tpu.memory_space<smem>>
    %610 = vector.extract_strided_slice %594 {offsets = [0, 12], sizes = [8, 80], strides = [1, 1]} : vector<8x104xf32> to vector<8x80xf32>
    %611 = vector.broadcast %609 : f32 to vector<8x80xf32>
    %612 = arith.mulf %611, %610 : vector<8x80xf32>
    %613 = arith.addf %608, %612 : vector<8x80xf32>
    %c18_120 = arith.constant 18 : index
    %614 = memref.load %arg13[%c18_120] : memref<21xf32, #tpu.memory_space<smem>>
    %615 = vector.extract_strided_slice %594 {offsets = [0, 16], sizes = [8, 80], strides = [1, 1]} : vector<8x104xf32> to vector<8x80xf32>
    %616 = vector.broadcast %614 : f32 to vector<8x80xf32>
    %617 = arith.mulf %616, %615 : vector<8x80xf32>
    %618 = arith.addf %613, %617 : vector<8x80xf32>
    %c19_121 = arith.constant 19 : index
    %619 = memref.load %arg13[%c19_121] : memref<21xf32, #tpu.memory_space<smem>>
    %620 = vector.extract_strided_slice %594 {offsets = [0, 20], sizes = [8, 80], strides = [1, 1]} : vector<8x104xf32> to vector<8x80xf32>
    %621 = vector.broadcast %619 : f32 to vector<8x80xf32>
    %622 = arith.mulf %621, %620 : vector<8x80xf32>
    %623 = arith.addf %618, %622 : vector<8x80xf32>
    %c20_122 = arith.constant 20 : index
    %624 = memref.load %arg13[%c20_122] : memref<21xf32, #tpu.memory_space<smem>>
    %625 = vector.extract_strided_slice %594 {offsets = [0, 24], sizes = [8, 80], strides = [1, 1]} : vector<8x104xf32> to vector<8x80xf32>
    %626 = vector.broadcast %624 : f32 to vector<8x80xf32>
    %627 = arith.mulf %626, %625 : vector<8x80xf32>
    %628 = arith.addf %623, %627 : vector<8x80xf32>
    %c2_123 = arith.constant 2 : index
    %629 = memref.load %arg14[%c2_123] : memref<3xf32, #tpu.memory_space<smem>>
    %630 = vector.broadcast %629 : f32 to vector<8x80xf32>
    %631 = arith.addf %628, %630 : vector<8x80xf32>
    %cst_124 = arith.constant 0.000000e+00 : f32
    %632 = vector.broadcast %cst_124 : f32 to vector<8x80xf32>
    %633 = arith.maximumf %631, %632 : vector<8x80xf32>
    %634 = vector.extract_strided_slice %633 {offsets = [0, 24], sizes = [8, 32], strides = [1, 1]} : vector<8x80xf32> to vector<8x32xf32>
    %635 = arith.addf %634, %549 : vector<8x32xf32>
    %cst_125 = arith.constant 0.000000e+00 : f32
    %636 = vector.broadcast %cst_125 : f32 to vector<8x32xf32>
    %637 = arith.maximumf %635, %636 : vector<8x32xf32>
    %638 = vector.extract_strided_slice %637 {offsets = [0, 31], sizes = [8, 1], strides = [1, 1]} : vector<8x32xf32> to vector<8x1xf32>
    %c2_126 = arith.constant 2 : index
    %639 = memref.load %arg16[%c2_126] : memref<5xf32, #tpu.memory_space<smem>>
    %640 = vector.broadcast %639 : f32 to vector<8x1xf32>
    %641 = arith.mulf %638, %640 : vector<8x1xf32>
    %642 = arith.addf %373, %641 : vector<8x1xf32>
    %c3_127 = arith.constant 3 : index
    %643 = memref.load %arg16[%c3_127] : memref<5xf32, #tpu.memory_space<smem>>
    %644 = vector.broadcast %643 : f32 to vector<8x1xf32>
    %645 = arith.mulf %5, %644 : vector<8x1xf32>
    %646 = arith.addf %642, %645 : vector<8x1xf32>
    %c4_128 = arith.constant 4 : index
    %647 = memref.load %arg16[%c4_128] : memref<5xf32, #tpu.memory_space<smem>>
    %648 = vector.broadcast %647 : f32 to vector<8x1xf32>
    %649 = arith.mulf %7, %648 : vector<8x1xf32>
    %650 = arith.addf %646, %649 : vector<8x1xf32>
    %651 = arith.negf %650 : vector<8x1xf32>
    %652 = math.exp %651 : vector<8x1xf32>
    %cst_129 = arith.constant 1.000000e+00 : f32
    %653 = vector.broadcast %cst_129 : f32 to vector<8x1xf32>
    %654 = arith.addf %653, %652 : vector<8x1xf32>
    %655 = arith.divf %653, %654 : vector<8x1xf32>
    %c0_130 = arith.constant 0 : index
    %c0_131 = arith.constant 0 : index
    %656 = vector.load %arg18[%c0_130, %c0_131] : memref<8x1xf32, #tpu.memory_space<vmem>>, vector<8x1xf32>
    tpu.vector_store %arg18[%c0_130, %c0_131], %655 {strides = array<i32>} : memref<8x1xf32, #tpu.memory_space<vmem>>, vector<8x1xf32>,
    return
  }
  func.func @transform_0(%arg0: i32) -> (i32, i32) {
    %c0_i32 = arith.constant 0 : i32
    %c0_i32_0 = arith.constant 0 : i32
    return %arg0, %c0_i32 : i32, i32
  }
  func.func @transform_1(%arg0: i32) -> (i32, i32) {
    %c0_i32 = arith.constant 0 : i32
    %c0_i32_0 = arith.constant 0 : i32
    return %arg0, %c0_i32 : i32, i32
  }
  func.func @transform_2(%arg0: i32) -> i32 {
    %c0_i32 = arith.constant 0 : i32
    %c0_i32_0 = arith.constant 0 : i32
    return %c0_i32 : i32
  }
  func.func @transform_3(%arg0: i32) -> i32 {
    %c0_i32 = arith.constant 0 : i32
    %c0_i32_0 = arith.constant 0 : i32
    return %c0_i32 : i32
  }
  func.func @transform_4(%arg0: i32) -> i32 {
    %c0_i32 = arith.constant 0 : i32
    %c0_i32_0 = arith.constant 0 : i32
    return %c0_i32 : i32
  }
  func.func @transform_5(%arg0: i32) -> i32 {
    %c0_i32 = arith.constant 0 : i32
    %c0_i32_0 = arith.constant 0 : i32
    return %c0_i32 : i32
  }
  func.func @transform_6(%arg0: i32) -> i32 {
    %c0_i32 = arith.constant 0 : i32
    %c0_i32_0 = arith.constant 0 : i32
    return %c0_i32 : i32
  }
  func.func @transform_7(%arg0: i32) -> i32 {
    %c0_i32 = arith.constant 0 : i32
    %c0_i32_0 = arith.constant 0 : i32
    return %c0_i32 : i32
  }
  func.func @transform_8(%arg0: i32) -> i32 {
    %c0_i32 = arith.constant 0 : i32
    %c0_i32_0 = arith.constant 0 : i32
    return %c0_i32 : i32
  }
  func.func @transform_9(%arg0: i32) -> i32 {
    %c0_i32 = arith.constant 0 : i32
    %c0_i32_0 = arith.constant 0 : i32
    return %c0_i32 : i32
  }
  func.func @transform_10(%arg0: i32) -> i32 {
    %c0_i32 = arith.constant 0 : i32
    %c0_i32_0 = arith.constant 0 : i32
    return %c0_i32 : i32
  }
  func.func @transform_11(%arg0: i32) -> i32 {
    %c0_i32 = arith.constant 0 : i32
    %c0_i32_0 = arith.constant 0 : i32
    return %c0_i32 : i32
  }
  func.func @transform_12(%arg0: i32) -> i32 {
    %c0_i32 = arith.constant 0 : i32
    %c0_i32_0 = arith.constant 0 : i32
    return %c0_i32 : i32
  }
  func.func @transform_13(%arg0: i32) -> i32 {
    %c0_i32 = arith.constant 0 : i32
    %c0_i32_0 = arith.constant 0 : i32
    return %c0_i32 : i32
  }
  func.func @transform_14(%arg0: i32) -> (i32, i32) {
    %c0_i32 = arith.constant 0 : i32
    %c0_i32_0 = arith.constant 0 : i32
    %c0_i32_1 = arith.constant 0 : i32
    return %c0_i32, %c0_i32_0 : i32, i32
  }
  func.func @transform_15(%arg0: i32) -> i32 {
    %c0_i32 = arith.constant 0 : i32
    %c0_i32_0 = arith.constant 0 : i32
    return %c0_i32 : i32
  }
  func.func @transform_16(%arg0: i32) -> i32 {
    %c0_i32 = arith.constant 0 : i32
    %c0_i32_0 = arith.constant 0 : i32
    return %c0_i32 : i32
  }
  func.func @transform_17(%arg0: i32) -> (i32, i32) {
    %c0_i32 = arith.constant 0 : i32
    %c0_i32_0 = arith.constant 0 : i32
    return %arg0, %c0_i32 : i32, i32
  }
}

</mosaic_0001>

<llo_original>
// kernel: tpu_custom_call.1
$region0: #{tpu_custom_call.1}
  #allocation0 [shape = 'u32[]', space=smem, size = 0x4, offset = 0x4, fixed_abs, tag = 'smem constant byte address 0x4 - core index']
  #allocation1 [shape = 'u32[72,128]{1,0:T(1,128)}', space=vmem, size = 0x9000, scoped, tag = 'internal scratch']
  #allocation2 [shape = 'f32[1]{0:T(128)S(6)}', space=smem, size = 0x200, scoped, tag = 'scoped memory for tpu_custom_call.1']
  %s0 = inlined_call_operand.hbm [shape: f32[8,32], index: 0, kind: input, shape index: {}]
  %s1 = inlined_call_operand.hbm [shape: f32[8,32], index: 1, kind: input, shape index: {}]
  %s2 = inlined_call_operand.vmem [shape: f32[9], index: 2, kind: input, shape index: {}]
  %s3 = inlined_call_operand.vmem [shape: f32[3], index: 3, kind: input, shape index: {}]
  %s4 = inlined_call_operand.vmem [shape: f32[9], index: 4, kind: input, shape index: {}]
  %s5 = inlined_call_operand.vmem [shape: f32[3], index: 5, kind: input, shape index: {}]
  %s6 = inlined_call_operand.vmem [shape: f32[15], index: 6, kind: input, shape index: {}]
  %s7 = inlined_call_operand.vmem [shape: f32[3], index: 7, kind: input, shape index: {}]
  %s8 = inlined_call_operand.vmem [shape: f32[15], index: 8, kind: input, shape index: {}]
  %s9 = inlined_call_operand.vmem [shape: f32[3], index: 9, kind: input, shape index: {}]
  %s10 = inlined_call_operand.vmem [shape: f32[21], index: 10, kind: input, shape index: {}]
  %s11 = inlined_call_operand.vmem [shape: f32[3], index: 11, kind: input, shape index: {}]
  %s12 = inlined_call_operand.vmem [shape: f32[21], index: 12, kind: input, shape index: {}]
  %s13 = inlined_call_operand.vmem [shape: f32[3], index: 13, kind: input, shape index: {}]
  %s14 = inlined_call_operand.vmem [shape: f32[1,32], index: 14, kind: input, shape index: {}]
  %s15 = inlined_call_operand.vmem [shape: f32[5], index: 15, kind: input, shape index: {}]
  %s16 = inlined_call_operand.<no memory space> [shape: f32[1], index: 16, kind: input, shape index: {}]
  %s17 = inlined_call_operand.vmem [shape: f32[8,1], index: 17, kind: output, shape index: {}]
  %s18 = sld [smem:[#allocation0]]
  $region138: #{tpu_custom_call.1} parent=0
    _
  %s20 = ssub.s32 1, %s18
  %s21 = scalar_select 0, %s20, %s18
  %22 = sst [smem:[#allocation2]] %s16
  $region1: #{tpu_custom_call.1} parent=0
    #allocation3 [shape = 'u8[4096]{0}', space=vmem, size = 0x1000, scoped, tag = 'input window, operand 0, single buffered']
    #allocation4 [shape = 's32[1]{0}', space=sflag, size = 0x4, scoped, tag = 'scoped memory for tpu_custom_call.1']
    #allocation5 [shape = 's32[1]{0}', space=sflag, size = 0x4, scoped, tag = 'scoped memory for tpu_custom_call.1']
    #allocation6 [shape = 'u8[4096]{0}', space=vmem, size = 0x1000, scoped, tag = 'input window, operand 1, single buffered']
    #allocation7 [shape = 's32[1]{0}', space=sflag, size = 0x4, scoped, tag = 'scoped memory for tpu_custom_call.1']
    #allocation8 [shape = 'u8[512]{0}', space=smem, size = 0x200, scoped, tag = 'input window, operand 2, single buffered']
    #allocation9 [shape = 'u8[512]{0}', space=smem, size = 0x200, scoped, tag = 'input window, operand 3, single buffered']
    #allocation10 [shape = 's32[1]{0}', space=sflag, size = 0x4, scoped, tag = 'scoped memory for tpu_custom_call.1']
    #allocation11 [shape = 'u8[512]{0}', space=smem, size = 0x200, scoped, tag = 'input window, operand 4, single buffered']
    #allocation12 [shape = 'u8[512]{0}', space=smem, size = 0x200, scoped, tag = 'input window, operand 5, single buffered']
    #allocation13 [shape = 's32[1]{0}', space=sflag, size = 0x4, scoped, tag = 'scoped memory for tpu_custom_call.1']
    #allocation14 [shape = 'u8[512]{0}', space=smem, size = 0x200, scoped, tag = 'input window, operand 6, single buffered']
    #allocation15 [shape = 'u8[512]{0}', space=smem, size = 0x200, scoped, tag = 'input window, operand 7, single buffered']
    #allocation16 [shape = 's32[1]{0}', space=sflag, size = 0x4, scoped, tag = 'scoped memory for tpu_custom_call.1']
    #allocation17 [shape = 'u8[512]{0}', space=smem, size = 0x200, scoped, tag = 'input window, operand 8, single buffered']
    #allocation18 [shape = 'u8[512]{0}', space=smem, size = 0x200, scoped, tag = 'input window, operand 9, single buffered']
    #allocation19 [shape = 's32[1]{0}', space=sflag, size = 0x4, scoped, tag = 'scoped memory for tpu_custom_call.1']
    #allocation20 [shape = 'u8[512]{0}', space=smem, size = 0x200, scoped, tag = 'input window, operand 10, single buffered']
    #allocation21 [shape = 'u8[512]{0}', space=smem, size = 0x200, scoped, tag = 'input window, operand 11, single buffered']
    #allocation22 [shape = 's32[1]{0}', space=sflag, size = 0x4, scoped, tag = 'scoped memory for tpu_custom_call.1']
    #allocation23 [shape = 'u8[512]{0}', space=smem, size = 0x200, scoped, tag = 'input window, operand 12, single buffered']
    #allocation24 [shape = 'u8[512]{0}', space=smem, size = 0x200, scoped, tag = 'input window, operand 13, single buffered']
    #allocation25 [shape = 's32[1]{0}', space=sflag, size = 0x4, scoped, tag = 'scoped memory for tpu_custom_call.1']
    #allocation26 [shape = 'u8[512]{0}', space=smem, size = 0x200, scoped, tag = 'input window, operand 15, single buffered']
    %23 = vsyncpa [#allocation4], 0
    %24 = vsyncpa [#allocation7], 0
    %25 = vsyncpa [#allocation5], 0
    %26 = vsyncpa [#allocation10], 0
    %27 = vsyncpa [#allocation13], 0
    %28 = vsyncpa [#allocation16], 0
    %29 = vsyncpa [#allocation19], 0
    %30 = vsyncpa [#allocation22], 0
    %31 = vsyncpa [#allocation25], 0
    // Predicated region
    $region2: #{tpu_custom_call.1} parent=1 // pred_check
      _
    $region3: #{tpu_custom_call.1} parent=1 // pred_check_branch
      %33 = sbr.rel (0) target = $region5
    $region4: #{tpu_custom_call.1} parent=1 // pred_region
      %35 = vsyncadd [#allocation4], 0
      %s37 = sshll.u32 %s0, 4
      %s38 = int_to_ptr.hbm [resolvable:$true] %s37
      %s39 = sshll.u32 [#allocation3], 4
      %s40 = int_to_ptr.vmem [resolvable:$true] %s39
      %42 = dma.hbm_to_vmem [thread:$0]  %s38, 128, %s40, [#allocation4]
    $region5: #{tpu_custom_call.1} parent=1 // pred_fallthru
      _
    // Predicated region
    $region6: #{tpu_custom_call.1} parent=1 // pred_check
      _
    $region7: #{tpu_custom_call.1} parent=1 // pred_check_branch
      %44 = sbr.rel (0) target = $region9
    $region8: #{tpu_custom_call.1} parent=1 // pred_region
      %46 = vsyncadd [#allocation7], 0
      %s48 = sshll.u32 %s1, 4
      %s49 = int_to_ptr.hbm [resolvable:$true] %s48
      %s50 = sshll.u32 [#allocation6], 4
      %s51 = int_to_ptr.vmem [resolvable:$true] %s50
      %53 = dma.hbm_to_vmem [thread:$0]  %s49, 128, %s51, [#allocation7]
    $region9: #{tpu_custom_call.1} parent=1 // pred_fallthru
      _
    // Predicated region
    $region10: #{tpu_custom_call.1} parent=1 // pred_check
      _
    $region11: #{tpu_custom_call.1} parent=1 // pred_check_branch
      %55 = sbr.rel (0) target = $region13
    $region12: #{tpu_custom_call.1} parent=1 // pred_region
      %57 = vsyncadd [#allocation5], 0
      %s59 = sshll.u32 %s2, 4
      %s60 = int_to_ptr.vmem [resolvable:$true] %s59
      %62 = dma.vmem_to_smem %s60, 16, [#allocation8], [#allocation5]
    $region13: #{tpu_custom_call.1} parent=1 // pred_fallthru
      _
    // Predicated region
    $region14: #{tpu_custom_call.1} parent=1 // pred_check
      _
    $region15: #{tpu_custom_call.1} parent=1 // pred_check_branch
      %64 = sbr.rel (0) target = $region17
    $region16: #{tpu_custom_call.1} parent=1 // pred_region
      %66 = vsyncadd [#allocation10], 0
      %s68 = sshll.u32 %s3, 4
      %s69 = int_to_ptr.vmem [resolvable:$true] %s68
      %71 = dma.vmem_to_smem %s69, 16, [#allocation9], [#allocation10]
    $region17: #{tpu_custom_call.1} parent=1 // pred_fallthru
      _
    // Predicated region
    $region18: #{tpu_custom_call.1} parent=1 // pred_check
      _
    $region19: #{tpu_custom_call.1} parent=1 // pred_check_branch
      %73 = sbr.rel (0) target = $region21
    $region20: #{tpu_custom_call.1} parent=1 // pred_region
      %75 = vsyncadd [#allocation10], 0
      %s77 = sshll.u32 %s4, 4
      %s78 = int_to_ptr.vmem [resolvable:$true] %s77
      %80 = dma.vmem_to_smem %s78, 16, [#allocation11], [#allocation10]
    $region21: #{tpu_custom_call.1} parent=1 // pred_fallthru
      _
    // Predicated region
    $region22: #{tpu_custom_call.1} parent=1 // pred_check
      _
    $region23: #{tpu_custom_call.1} parent=1 // pred_check_branch
      %82 = sbr.rel (0) target = $region25
    $region24: #{tpu_custom_call.1} parent=1 // pred_region
      %84 = vsyncadd [#allocation13], 0
      %s86 = sshll.u32 %s5, 4
      %s87 = int_to_ptr.vmem [resolvable:$true] %s86
      %89 = dma.vmem_to_smem %s87, 16, [#allocation12], [#allocation13]
    $region25: #{tpu_custom_call.1} parent=1 // pred_fallthru
      _
    // Predicated region
    $region26: #{tpu_custom_call.1} parent=1 // pred_check
      _
    $region27: #{tpu_custom_call.1} parent=1 // pred_check_branch
      %91 = sbr.rel (0) target = $region29
    $region28: #{tpu_custom_call.1} parent=1 // pred_region
      %93 = vsyncadd [#allocation13], 0
      %s95 = sshll.u32 %s6, 4
      %s96 = int_to_ptr.vmem [resolvable:$true] %s95
      %98 = dma.vmem_to_smem %s96, 16, [#allocation14], [#allocation13]
    $region29: #{tpu_custom_call.1} parent=1 // pred_fallthru
      _
    // Predicated region
    $region30: #{tpu_custom_call.1} parent=1 // pred_check
      _
    $region31: #{tpu_custom_call.1} parent=1 // pred_check_branch
      %100 = sbr.rel (0) target = $region33
    $region32: #{tpu_custom_call.1} parent=1 // pred_region
      %102 = vsyncadd [#allocation16], 0
      %s104 = sshll.u32 %s7, 4
      %s105 = int_to_ptr.vmem [resolvable:$true] %s104
      %107 = dma.vmem_to_smem %s105, 16, [#allocation15], [#allocation16]
    $region33: #{tpu_custom_call.1} parent=1 // pred_fallthru
      _
    // Predicated region
    $region34: #{tpu_custom_call.1} parent=1 // pred_check
      _
    $region35: #{tpu_custom_call.1} parent=1 // pred_check_branch
      %109 = sbr.rel (0) target = $region37
    $region36: #{tpu_custom_call.1} parent=1 // pred_region
      %111 = vsyncadd [#allocation16], 0
      %s113 = sshll.u32 %s8, 4
      %s114 = int_to_ptr.vmem [resolvable:$true] %s113
      %116 = dma.vmem_to_smem %s114, 16, [#allocation17], [#allocation16]
    $region37: #{tpu_custom_call.1} parent=1 // pred_fallthru
      _
    // Predicated region
    $region38: #{tpu_custom_call.1} parent=1 // pred_check
      _
    $region39: #{tpu_custom_call.1} parent=1 // pred_check_branch
      %118 = sbr.rel (0) target = $region41
    $region40: #{tpu_custom_call.1} parent=1 // pred_region
      %120 = vsyncadd [#allocation19], 0
      %s122 = sshll.u32 %s9, 4
      %s123 = int_to_ptr.vmem [resolvable:$true] %s122
      %125 = dma.vmem_to_smem %s123, 16, [#allocation18], [#allocation19]
    $region41: #{tpu_custom_call.1} parent=1 // pred_fallthru
      _
    // Predicated region
    $region42: #{tpu_custom_call.1} parent=1 // pred_check
      _
    $region43: #{tpu_custom_call.1} parent=1 // pred_check_branch
      %127 = sbr.rel (0) target = $region45
    $region44: #{tpu_custom_call.1} parent=1 // pred_region
      %129 = vsyncadd [#allocation19], 0
      %s131 = sshll.u32 %s10, 4
      %s132 = int_to_ptr.vmem [resolvable:$true] %s131
      %134 = dma.vmem_to_smem %s132, 16, [#allocation20], [#allocation19]
    $region45: #{tpu_custom_call.1} parent=1 // pred_fallthru
      _
    // Predicated region
    $region46: #{tpu_custom_call.1} parent=1 // pred_check
      _
    $region47: #{tpu_custom_call.1} parent=1 // pred_check_branch
      %136 = sbr.rel (0) target = $region49
    $region48: #{tpu_custom_call.1} parent=1 // pred_region
      %138 = vsyncadd [#allocation22], 0
      %s140 = sshll.u32 %s11, 4
      %s141 = int_to_ptr.vmem [resolvable:$true] %s140
      %143 = dma.vmem_to_smem %s141, 16, [#allocation21], [#allocation22]
    $region49: #{tpu_custom_call.1} parent=1 // pred_fallthru
      _
    // Predicated region
    $region50: #{tpu_custom_call.1} parent=1 // pred_check
      _
    $region51: #{tpu_custom_call.1} parent=1 // pred_check_branch
      %145 = sbr.rel (0) target = $region53
    $region52: #{tpu_custom_call.1} parent=1 // pred_region
      %147 = vsyncadd [#allocation22], 0
      %s149 = sshll.u32 %s12, 4
      %s150 = int_to_ptr.vmem [resolvable:$true] %s149
      %152 = dma.vmem_to_smem %s150, 16, [#allocation23], [#allocation22]
    $region53: #{tpu_custom_call.1} parent=1 // pred_fallthru
      _
    // Predicated region
    $region54: #{tpu_custom_call.1} parent=1 // pred_check
      _
    $region55: #{tpu_custom_call.1} parent=1 // pred_check_branch
      %154 = sbr.rel (0) target = $region57
    $region56: #{tpu_custom_call.1} parent=1 // pred_region
      %156 = vsyncadd [#allocation25], 0
      %s158 = sshll.u32 %s13, 4
      %s159 = int_to_ptr.vmem [resolvable:$true] %s158
      %161 = dma.vmem_to_smem %s159, 16, [#allocation24], [#allocation25]
    $region57: #{tpu_custom_call.1} parent=1 // pred_fallthru
      _
    // Predicated region
    $region58: #{tpu_custom_call.1} parent=1 // pred_check
      _
    $region59: #{tpu_custom_call.1} parent=1 // pred_check_branch
      %163 = sbr.rel (0) target = $region61
    $region60: #{tpu_custom_call.1} parent=1 // pred_region
      _
    $region61: #{tpu_custom_call.1} parent=1 // pred_fallthru
      _
    // Predicated region
    $region62: #{tpu_custom_call.1} parent=1 // pred_check
      _
    $region63: #{tpu_custom_call.1} parent=1 // pred_check_branch
      %165 = sbr.rel (0) target = $region65
    $region64: #{tpu_custom_call.1} parent=1 // pred_region
      %167 = vsyncadd [#allocation25], 0
      %s169 = sshll.u32 %s15, 4
      %s170 = int_to_ptr.vmem [resolvable:$true] %s169
      %172 = dma.vmem_to_smem %s170, 16, [#allocation26], [#allocation25]
    $region65: #{tpu_custom_call.1} parent=1 // pred_fallthru
      _
    // Predicated region
    $region66: #{tpu_custom_call.1} parent=1 // pred_check
      _
    $region67: #{tpu_custom_call.1} parent=1 // pred_check_branch
      %174 = sbr.rel (0) target = $region69
    $region68: #{tpu_custom_call.1} parent=1 // pred_region
      _
    $region69: #{tpu_custom_call.1} parent=1 // pred_fallthru
      _
    // Predicated region
    $region70: #{tpu_custom_call.1} parent=1 // pred_check
      _
    $region71: #{tpu_custom_call.1} parent=1 // pred_check_branch
      %176 = sbr.rel (0) target = $region73
    $region72: #{tpu_custom_call.1} parent=1 // pred_region
      %178 = dma.done [#allocation4], 128
    $region73: #{tpu_custom_call.1} parent=1 // pred_fallthru
      _
    // Predicated region
    $region74: #{tpu_custom_call.1} parent=1 // pred_check
      _
    $region75: #{tpu_custom_call.1} parent=1 // pred_check_branch
      %180 = sbr.rel (0) target = $region77
    $region76: #{tpu_custom_call.1} parent=1 // pred_region
      %182 = dma.done [#allocation7], 128
    $region77: #{tpu_custom_call.1} parent=1 // pred_fallthru
      _
    // Predicated region
    $region78: #{tpu_custom_call.1} parent=1 // pred_check
      _
    $region79: #{tpu_custom_call.1} parent=1 // pred_check_branch
      %184 = sbr.rel (0) target = $region81
    $region80: #{tpu_custom_call.1} parent=1 // pred_region
      %186 = dma.done [#allocation5], 16
    $region81: #{tpu_custom_call.1} parent=1 // pred_fallthru
      _
    // Predicated region
    $region82: #{tpu_custom_call.1} parent=1 // pred_check
      _
    $region83: #{tpu_custom_call.1} parent=1 // pred_check_branch
      %188 = sbr.rel (0) target = $region85
    $region84: #{tpu_custom_call.1} parent=1 // pred_region
      %190 = dma.done [#allocation10], 16
    $region85: #{tpu_custom_call.1} parent=1 // pred_fallthru
      _
    // Predicated region
    $region86: #{tpu_custom_call.1} parent=1 // pred_check
      _
    $region87: #{tpu_custom_call.1} parent=1 // pred_check_branch
      %192 = sbr.rel (0) target = $region89
    $region88: #{tpu_custom_call.1} parent=1 // pred_region
      %194 = dma.done [#allocation10], 16
    $region89: #{tpu_custom_call.1} parent=1 // pred_fallthru
      _
    // Predicated region
    $region90: #{tpu_custom_call.1} parent=1 // pred_check
      _
    $region91: #{tpu_custom_call.1} parent=1 // pred_check_branch
      %196 = sbr.rel (0) target = $region93
    $region92: #{tpu_custom_call.1} parent=1 // pred_region
      %198 = dma.done [#allocation13], 16
    $region93: #{tpu_custom_call.1} parent=1 // pred_fallthru
      _
    // Predicated region
    $region94: #{tpu_custom_call.1} parent=1 // pred_check
      _
    $region95: #{tpu_custom_call.1} parent=1 // pred_check_branch
      %200 = sbr.rel (0) target = $region97
    $region96: #{tpu_custom_call.1} parent=1 // pred_region
      %202 = dma.done [#allocation13], 16
    $region97: #{tpu_custom_call.1} parent=1 // pred_fallthru
      _
    // Predicated region
    $region98: #{tpu_custom_call.1} parent=1 // pred_check
      _
    $region99: #{tpu_custom_call.1} parent=1 // pred_check_branch
      %204 = sbr.rel (0) target = $region101
    $region100: #{tpu_custom_call.1} parent=1 // pred_region
      %206 = dma.done [#allocation16], 16
    $region101: #{tpu_custom_call.1} parent=1 // pred_fallthru
      _
    // Predicated region
    $region102: #{tpu_custom_call.1} parent=1 // pred_check
      _
    $region103: #{tpu_custom_call.1} parent=1 // pred_check_branch
      %208 = sbr.rel (0) target = $region105
    $region104: #{tpu_custom_call.1} parent=1 // pred_region
      %210 = dma.done [#allocation16], 16
    $region105: #{tpu_custom_call.1} parent=1 // pred_fallthru
      _
    // Predicated region
    $region106: #{tpu_custom_call.1} parent=1 // pred_check
      _
    $region107: #{tpu_custom_call.1} parent=1 // pred_check_branch
      %212 = sbr.rel (0) target = $region109
    $region108: #{tpu_custom_call.1} parent=1 // pred_region
      %214 = dma.done [#allocation19], 16
    $region109: #{tpu_custom_call.1} parent=1 // pred_fallthru
      _
    // Predicated region
    $region110: #{tpu_custom_call.1} parent=1 // pred_check
      _
    $region111: #{tpu_custom_call.1} parent=1 // pred_check_branch
      %216 = sbr.rel (0) target = $region113
    $region112: #{tpu_custom_call.1} parent=1 // pred_region
      %218 = dma.done [#allocation19], 16
    $region113: #{tpu_custom_call.1} parent=1 // pred_fallthru
      _
    // Predicated region
    $region114: #{tpu_custom_call.1} parent=1 // pred_check
      _
    $region115: #{tpu_custom_call.1} parent=1 // pred_check_branch
      %220 = sbr.rel (0) target = $region117
    $region116: #{tpu_custom_call.1} parent=1 // pred_region
      %222 = dma.done [#allocation22], 16
    $region117: #{tpu_custom_call.1} parent=1 // pred_fallthru
      _
    // Predicated region
    $region118: #{tpu_custom_call.1} parent=1 // pred_check
      _
    $region119: #{tpu_custom_call.1} parent=1 // pred_check_branch
      %224 = sbr.rel (0) target = $region121
    $region120: #{tpu_custom_call.1} parent=1 // pred_region
      %226 = dma.done [#allocation22], 16
    $region121: #{tpu_custom_call.1} parent=1 // pred_fallthru
      _
    // Predicated region
    $region122: #{tpu_custom_call.1} parent=1 // pred_check
      _
    $region123: #{tpu_custom_call.1} parent=1 // pred_check_branch
      %228 = sbr.rel (0) target = $region125
    $region124: #{tpu_custom_call.1} parent=1 // pred_region
      %230 = dma.done [#allocation25], 16
    $region125: #{tpu_custom_call.1} parent=1 // pred_fallthru
      _
    // Predicated region
    $region126: #{tpu_custom_call.1} parent=1 // pred_check
      _
    $region127: #{tpu_custom_call.1} parent=1 // pred_check_branch
      %232 = sbr.rel (0) target = $region129
    $region128: #{tpu_custom_call.1} parent=1 // pred_region
      %234 = dma.done [#allocation25], 16
    $region129: #{tpu_custom_call.1} parent=1 // pred_fallthru
      _
    %235 = sfence
    %v236 = vld [vmem:[#allocation3] sm:$0xff]
    %v237 = vld [vmem:[#allocation6] sm:$0xff]
    %vm238 = vcmask 261120
    %v239 = vsel %vm238, %v236, 0.0
    %240 = vadd.xlane.f32.xlu0 %v239
    %v241 = vpop.xlane.xlu0 %240
    %v242 = vrcp.pop 32.0
    %v243 = vmul.f32 32.0, %v242
    %v244 = vsub.f32 1.0, %v243
    %v245 = vmul.f32 %v242, %v244
    %v246 = vadd.f32 %v242, %v245
    %vm247 = vweird.f32 %v242
    %v248 = vsel %vm247, %v242, %v246
    %v249 = vmul.f32 %v241, %v248
    %v250 = vsel %vm238, %v236, inf
    %251 = vmin.xlane.f32.xlu0 %v250
    %v252 = vpop.xlane.xlu0 %251
    %v253 = vld [vmem:[%s14] sm:$0x1]
    %v255 = vperm.slane %v253, 0
    %v257 = vmul.f32 %v237, %v255
    %v258 = vsel %vm238, %v257, 0.0
    %259 = vadd.xlane.f32.xlu0 %v258
    %v260 = vpop.xlane.xlu0 %259
    %s261 = sld [smem:[#allocation2]]
    %v262 = vstv %s261
    %v263 = vadd.f32 %v260, %v262
    %265 = vrot.lane.b32.xlu0 %v236, 98
    %v266 = vpop.permute.xlu0 %265
    %268 = vrot.lane.b32.xlu0 %v236, 2
    %v269 = vpop.permute.xlu0 %268
    %271 = vrot.lane.b32.xlu0 %v236, 34
    %v272 = vpop.permute.xlu0 %271
    %vm274 = vcmask 15360
    %v275 = vsel %vm274, %v266, %v269
    %vm276 = vcmask 277504
    %v277 = vsel %vm276, %v275, %v272
    %s278 = sld [smem:[#allocation8]]
    %v279 = vstv %s278
    %v280 = vmul.f32 %v279, %v277
    %s281 = sld [smem:[#allocation8 + $0x1]]
    %v282 = vstv %s281
    %v283 = vmul.f32 %v282, %v277
    %285 = vrot.lane.b32.xlu0 %v283, 127
    %v286 = vpop.permute.xlu0 %285
    %v288 = vadd.f32 %v280, %v286
    %s289 = sld [smem:[#allocation8 + $0x2]]
    %v290 = vstv %s289
    %v291 = vmul.f32 %v290, %v277
    %293 = vrot.lane.b32.xlu0 %v291, 126
    %v294 = vpop.permute.xlu0 %293
    %v296 = vadd.f32 %v288, %v294
    %s297 = sld [smem:[#allocation9]]
    %v298 = vstv %s297
    %v299 = vadd.f32 %v296, %v298
    %v300 = vmax.f32 %v299, 0.0
    %302 = vrot.lane.b32.xlu0 %v300, 96
    %v303 = vpop.permute.xlu0 %302
    %305 = vrot.lane.b32.xlu0 %v300, 2
    %v306 = vpop.permute.xlu0 %305
    %308 = vrot.lane.b32.xlu0 %v300, 36
    %v309 = vpop.permute.xlu0 %308
    %v311 = vsel %vm274, %v303, %v306
    %vm312 = vcmask 293888
    %v313 = vsel %vm312, %v311, %v309
    %s314 = sld [smem:[#allocation11]]
    %v315 = vstv %s314
    %v316 = vmul.f32 %v315, %v313
    %s317 = sld [smem:[#allocation11 + $0x1]]
    %v318 = vstv %s317
    %v319 = vmul.f32 %v318, %v313
    %321 = vrot.lane.b32.xlu0 %v319, 127
    %v322 = vpop.permute.xlu0 %321
    %v324 = vadd.f32 %v316, %v322
    %s325 = sld [smem:[#allocation11 + $0x2]]
    %v326 = vstv %s325
    %v327 = vmul.f32 %v326, %v313
    %329 = vrot.lane.b32.xlu0 %v327, 126
    %v330 = vpop.permute.xlu0 %329
    %v332 = vadd.f32 %v324, %v330
    %s333 = sld [smem:[#allocation12]]
    %v334 = vstv %s333
    %v335 = vadd.f32 %v332, %v334
    %v336 = vmax.f32 %v335, 0.0
    %v337 = vadd.f32 %v336, %v269
    %v338 = vmax.f32 %v337, 0.0
    %340 = vrot.lane.b32.xlu0 %v338, 98
    %v341 = vpop.permute.xlu0 %340
    %343 = vrot.lane.b32.xlu0 %v338, 2
    %v344 = vpop.permute.xlu0 %343
    %346 = vrot.lane.b32.xlu0 %v338, 34
    %v347 = vpop.permute.xlu0 %346
    %vm349 = vcmask 31744
    %v350 = vsel %vm349, %v341, %v344
    %v351 = vsel %vm312, %v350, %v347
    %s352 = sld [smem:[#allocation8 + $0x3]]
    %v353 = vstv %s352
    %v354 = vmul.f32 %v353, %v351
    %s355 = sld [smem:[#allocation8 + $0x4]]
    %v356 = vstv %s355
    %v357 = vmul.f32 %v356, %v351
    %359 = vrot.lane.b32.xlu0 %v357, 126
    %v360 = vpop.permute.xlu0 %359
    %v362 = vadd.f32 %v354, %v360
    %s363 = sld [smem:[#allocation8 + $0x5]]
    %v364 = vstv %s363
    %v365 = vmul.f32 %v364, %v351
    %367 = vrot.lane.b32.xlu0 %v365, 124
    %v368 = vpop.permute.xlu0 %367
    %v370 = vadd.f32 %v362, %v368
    %s371 = sld [smem:[#allocation9 + $0x1]]
    %v372 = vstv %s371
    %v373 = vadd.f32 %v370, %v372
    %v374 = vmax.f32 %v373, 0.0
    %376 = vrot.lane.b32.xlu0 %v374, 96
    %v377 = vpop.permute.xlu0 %376
    %379 = vrot.lane.b32.xlu0 %v374, 4
    %v380 = vpop.permute.xlu0 %379
    %382 = vrot.lane.b32.xlu0 %v374, 40
    %v383 = vpop.permute.xlu0 %382
    %v385 = vsel %vm349, %v377, %v380
    %vm386 = vcmask 326656
    %v387 = vsel %vm386, %v385, %v383
    %s388 = sld [smem:[#allocation11 + $0x3]]
    %v389 = vstv %s388
    %v390 = vmul.f32 %v389, %v387
    %s391 = sld [smem:[#allocation11 + $0x4]]
    %v392 = vstv %s391
    %v393 = vmul.f32 %v392, %v387
    %395 = vrot.lane.b32.xlu0 %v393, 126
    %v396 = vpop.permute.xlu0 %395
    %v398 = vadd.f32 %v390, %v396
    %s399 = sld [smem:[#allocation11 + $0x5]]
    %v400 = vstv %s399
    %v401 = vmul.f32 %v400, %v387
    %403 = vrot.lane.b32.xlu0 %v401, 124
    %v404 = vpop.permute.xlu0 %403
    %v406 = vadd.f32 %v398, %v404
    %s407 = sld [smem:[#allocation12 + $0x1]]
    %v408 = vstv %s407
    %v409 = vadd.f32 %v406, %v408
    %v410 = vmax.f32 %v409, 0.0
    %v411 = vadd.f32 %v410, %v344
    %v412 = vmax.f32 %v411, 0.0
    %414 = vrot.lane.b32.xlu0 %v412, 100
    %v415 = vpop.permute.xlu0 %414
    %417 = vrot.lane.b32.xlu0 %v412, 4
    %v418 = vpop.permute.xlu0 %417
    %420 = vrot.lane.b32.xlu0 %v412, 36
    %v421 = vpop.permute.xlu0 %420
    %vm423 = vcmask 64512
    %v424 = vsel %vm423, %v415, %v418
    %v425 = vsel %vm386, %v424, %v421
    %s426 = sld [smem:[#allocation8 + $0x6]]
    %v427 = vstv %s426
    %v428 = vmul.f32 %v427, %v425
    %s429 = sld [smem:[#allocation8 + $0x7]]
    %v430 = vstv %s429
    %v431 = vmul.f32 %v430, %v425
    %433 = vrot.lane.b32.xlu0 %v431, 124
    %v434 = vpop.permute.xlu0 %433
    %v436 = vadd.f32 %v428, %v434
    %s437 = sld [smem:[#allocation8 + $0x8]]
    %v438 = vstv %s437
    %v439 = vmul.f32 %v438, %v425
    %441 = vrot.lane.b32.xlu0 %v439, 120
    %v442 = vpop.permute.xlu0 %441
    %v444 = vadd.f32 %v436, %v442
    %s445 = sld [smem:[#allocation9 + $0x2]]
    %v446 = vstv %s445
    %v447 = vadd.f32 %v444, %v446
    %v448 = vmax.f32 %v447, 0.0
    %450 = vrot.lane.b32.xlu0 %v448, 96
    %v451 = vpop.permute.xlu0 %450
    %453 = vrot.lane.b32.xlu0 %v448, 8
    %v454 = vpop.permute.xlu0 %453
    %456 = vrot.lane.b32.xlu0 %v448, 48
    %v457 = vpop.permute.xlu0 %456
    %v459 = vsel %vm423, %v451, %v454
    %vm460 = vcmask 392192
    %v461 = vsel %vm460, %v459, %v457
    %s462 = sld [smem:[#allocation11 + $0x6]]
    %v463 = vstv %s462
    %v464 = vmul.f32 %v463, %v461
    %s465 = sld [smem:[#allocation11 + $0x7]]
    %v466 = vstv %s465
    %v467 = vmul.f32 %v466, %v461
    %469 = vrot.lane.b32.xlu0 %v467, 124
    %v470 = vpop.permute.xlu0 %469
    %v472 = vadd.f32 %v464, %v470
    %s473 = sld [smem:[#allocation11 + $0x8]]
    %v474 = vstv %s473
    %v475 = vmul.f32 %v474, %v461
    %477 = vrot.lane.b32.xlu0 %v475, 120
    %v478 = vpop.permute.xlu0 %477
    %v480 = vadd.f32 %v472, %v478
    %s481 = sld [smem:[#allocation12 + $0x2]]
    %v482 = vstv %s481
    %v483 = vadd.f32 %v480, %v482
    %v484 = vmax.f32 %v483, 0.0
    %v485 = vadd.f32 %v484, %v418
    %v486 = vmax.f32 %v485, 0.0
    %s487 = sld [smem:[#allocation26]]
    %v488 = vstv %s487
    %v489 = vmul.f32 %v486, %v488
    %v490 = vadd.f32 %v263, %v489
    %491 = vrot.lane.b32.xlu0 %v236, 100
    %v492 = vpop.permute.xlu0 %491
    %494 = vrot.lane.b32.xlu0 %v236, 4
    %v495 = vpop.permute.xlu0 %494
    %497 = vrot.lane.b32.xlu0 %v236, 36
    %v498 = vpop.permute.xlu0 %497
    %v500 = vsel %vm349, %v492, %v495
    %v501 = vsel %vm312, %v500, %v498
    %s502 = sld [smem:[#allocation14]]
    %v503 = vstv %s502
    %v504 = vmul.f32 %v503, %v501
    %s505 = sld [smem:[#allocation14 + $0x1]]
    %v506 = vstv %s505
    %v507 = vmul.f32 %v506, %v501
    %509 = vrot.lane.b32.xlu0 %v507, 127
    %v510 = vpop.permute.xlu0 %509
    %v512 = vadd.f32 %v504, %v510
    %s513 = sld [smem:[#allocation14 + $0x2]]
    %v514 = vstv %s513
    %v515 = vmul.f32 %v514, %v501
    %517 = vrot.lane.b32.xlu0 %v515, 126
    %v518 = vpop.permute.xlu0 %517
    %v520 = vadd.f32 %v512, %v518
    %s521 = sld [smem:[#allocation14 + $0x3]]
    %v522 = vstv %s521
    %v523 = vmul.f32 %v522, %v501
    %525 = vrot.lane.b32.xlu0 %v523, 125
    %v526 = vpop.permute.xlu0 %525
    %v528 = vadd.f32 %v520, %v526
    %s529 = sld [smem:[#allocation14 + $0x4]]
    %v530 = vstv %s529
    %v531 = vmul.f32 %v530, %v501
    %533 = vrot.lane.b32.xlu0 %v531, 124
    %v534 = vpop.permute.xlu0 %533
    %v536 = vadd.f32 %v528, %v534
    %s537 = sld [smem:[#allocation15]]
    %v538 = vstv %s537
    %v539 = vadd.f32 %v536, %v538
    %v540 = vmax.f32 %v539, 0.0
    %542 = vrot.lane.b32.xlu0 %v540, 96
    %v543 = vpop.permute.xlu0 %542
    %545 = vrot.lane.b32.xlu0 %v540, 4
    %v546 = vpop.permute.xlu0 %545
    %548 = vrot.lane.b32.xlu0 %v540, 40
    %v549 = vpop.permute.xlu0 %548
    %v551 = vsel %vm349, %v543, %v546
    %v552 = vsel %vm386, %v551, %v549
    %s553 = sld [smem:[#allocation17]]
    %v554 = vstv %s553
    %v555 = vmul.f32 %v554, %v552
    %s556 = sld [smem:[#allocation17 + $0x1]]
    %v557 = vstv %s556
    %v558 = vmul.f32 %v557, %v552
    %560 = vrot.lane.b32.xlu0 %v558, 127
    %v561 = vpop.permute.xlu0 %560
    %v563 = vadd.f32 %v555, %v561
    %s564 = sld [smem:[#allocation17 + $0x2]]
    %v565 = vstv %s564
    %v566 = vmul.f32 %v565, %v552
    %568 = vrot.lane.b32.xlu0 %v566, 126
    %v569 = vpop.permute.xlu0 %568
    %v571 = vadd.f32 %v563, %v569
    %s572 = sld [smem:[#allocation17 + $0x3]]
    %v573 = vstv %s572
    %v574 = vmul.f32 %v573, %v552
    %576 = vrot.lane.b32.xlu0 %v574, 125
    %v577 = vpop.permute.xlu0 %576
    %v579 = vadd.f32 %v571, %v577
    %s580 = sld [smem:[#allocation17 + $0x4]]
    %v581 = vstv %s580
    %v582 = vmul.f32 %v581, %v552
    %584 = vrot.lane.b32.xlu0 %v582, 124
    %v585 = vpop.permute.xlu0 %584
    %v587 = vadd.f32 %v579, %v585
    %s588 = sld [smem:[#allocation18]]
    %v589 = vstv %s588
    %v590 = vadd.f32 %v587, %v589
    %v591 = vmax.f32 %v590, 0.0
    %v592 = vadd.f32 %v591, %v495
    %v593 = vmax.f32 %v592, 0.0
    %595 = vrot.lane.b32.xlu0 %v593, 100
    %v596 = vpop.permute.xlu0 %595
    %598 = vrot.lane.b32.xlu0 %v593, 4
    %v599 = vpop.permute.xlu0 %598
    %601 = vrot.lane.b32.xlu0 %v593, 36
    %v602 = vpop.permute.xlu0 %601
    %v604 = vsel %vm423, %v596, %v599
    %v605 = vsel %vm386, %v604, %v602
    %s606 = sld [smem:[#allocation14 + $0x5]]
    %v607 = vstv %s606
    %v608 = vmul.f32 %v607, %v605
    %s609 = sld [smem:[#allocation14 + $0x6]]
    %v610 = vstv %s609
    %v611 = vmul.f32 %v610, %v605
    %613 = vrot.lane.b32.xlu0 %v611, 126
    %v614 = vpop.permute.xlu0 %613
    %v616 = vadd.f32 %v608, %v614
    %s617 = sld [smem:[#allocation14 + $0x7]]
    %v618 = vstv %s617
    %v619 = vmul.f32 %v618, %v605
    %621 = vrot.lane.b32.xlu0 %v619, 124
    %v622 = vpop.permute.xlu0 %621
    %v624 = vadd.f32 %v616, %v622
    %s625 = sld [smem:[#allocation14 + $0x8]]
    %v626 = vstv %s625
    %v627 = vmul.f32 %v626, %v605
    %629 = vrot.lane.b32.xlu0 %v627, 122
    %v630 = vpop.permute.xlu0 %629
    %v632 = vadd.f32 %v624, %v630
    %s633 = sld [smem:[#allocation14 + $0x9]]
    %v634 = vstv %s633
    %v635 = vmul.f32 %v634, %v605
    %637 = vrot.lane.b32.xlu0 %v635, 120
    %v638 = vpop.permute.xlu0 %637
    %v640 = vadd.f32 %v632, %v638
    %s641 = sld [smem:[#allocation15 + $0x1]]
    %v642 = vstv %s641
    %v643 = vadd.f32 %v640, %v642
    %v644 = vmax.f32 %v643, 0.0
    %646 = vrot.lane.b32.xlu0 %v644, 96
    %v647 = vpop.permute.xlu0 %646
    %649 = vrot.lane.b32.xlu0 %v644, 8
    %v650 = vpop.permute.xlu0 %649
    %652 = vrot.lane.b32.xlu0 %v644, 48
    %v653 = vpop.permute.xlu0 %652
    %v655 = vsel %vm423, %v647, %v650
    %v656 = vsel %vm460, %v655, %v653
    %s657 = sld [smem:[#allocation17 + $0x5]]
    %v658 = vstv %s657
    %v659 = vmul.f32 %v658, %v656
    %s660 = sld [smem:[#allocation17 + $0x6]]
    %v661 = vstv %s660
    %v662 = vmul.f32 %v661, %v656
    %664 = vrot.lane.b32.xlu0 %v662, 126
    %v665 = vpop.permute.xlu0 %664
    %v667 = vadd.f32 %v659, %v665
    %s668 = sld [smem:[#allocation17 + $0x7]]
    %v669 = vstv %s668
    %v670 = vmul.f32 %v669, %v656
    %672 = vrot.lane.b32.xlu0 %v670, 124
    %v673 = vpop.permute.xlu0 %672
    %v675 = vadd.f32 %v667, %v673
    %s676 = sld [smem:[#allocation17 + $0x8]]
    %v677 = vstv %s676
    %v678 = vmul.f32 %v677, %v656
    %680 = vrot.lane.b32.xlu0 %v678, 122
    %v681 = vpop.permute.xlu0 %680
    %v683 = vadd.f32 %v675, %v681
    %s684 = sld [smem:[#allocation17 + $0x9]]
    %v685 = vstv %s684
    %v686 = vmul.f32 %v685, %v656
    %688 = vrot.lane.b32.xlu0 %v686, 120
    %v689 = vpop.permute.xlu0 %688
    %v691 = vadd.f32 %v683, %v689
    %s692 = sld [smem:[#allocation18 + $0x1]]
    %v693 = vstv %s692
    %v694 = vadd.f32 %v691, %v693
    %v695 = vmax.f32 %v694, 0.0
    %v696 = vadd.f32 %v695, %v599
    %v697 = vmax.f32 %v696, 0.0
    %699 = vrot.lane.b32.xlu0 %v697, 104
    %v700 = vpop.permute.xlu0 %699
    %702 = vrot.lane.b32.xlu0 %v697, 8
    %v703 = vpop.permute.xlu0 %702
    %705 = vrot.lane.b32.xlu0 %v697, 40
    %v706 = vpop.permute.xlu0 %705
    %vm708 = vcmask 130048
    %v709 = vsel %vm708, %v700, %v703
    %v710 = vsel %vm460, %v709, %v706
    %s711 = sld [smem:[#allocation14 + $0xa]]
    %v712 = vstv %s711
    %v713 = vmul.f32 %v712, %v710
    %s714 = sld [smem:[#allocation14 + $0xb]]
    %v715 = vstv %s714
    %v716 = vmul.f32 %v715, %v710
    %718 = vrot.lane.b32.xlu0 %v716, 124
    %v719 = vpop.permute.xlu0 %718
    %v721 = vadd.f32 %v713, %v719
    %s722 = sld [smem:[#allocation14 + $0xc]]
    %v723 = vstv %s722
    %v724 = vmul.f32 %v723, %v710
    %726 = vrot.lane.b32.xlu0 %v724, 120
    %v727 = vpop.permute.xlu0 %726
    %v729 = vadd.f32 %v721, %v727
    %s730 = sld [smem:[#allocation14 + $0xd]]
    %v731 = vstv %s730
    %v732 = vmul.f32 %v731, %v710
    %734 = vrot.lane.b32.xlu0 %v732, 116
    %v735 = vpop.permute.xlu0 %734
    %v737 = vadd.f32 %v729, %v735
    %s738 = sld [smem:[#allocation14 + $0xe]]
    %v739 = vstv %s738
    %v740 = vmul.f32 %v739, %v710
    %742 = vrot.lane.b32.xlu0 %v740, 112
    %v743 = vpop.permute.xlu0 %742
    %v745 = vadd.f32 %v737, %v743
    %s746 = sld [smem:[#allocation15 + $0x2]]
    %v747 = vstv %s746
    %v748 = vadd.f32 %v745, %v747
    %v749 = vmax.f32 %v748, 0.0
    %751 = vrot.lane.b32.xlu0 %v749, 96
    %v752 = vpop.permute.xlu0 %751
    %754 = vrot.lane.b32.xlu0 %v749, 16
    %v755 = vpop.permute.xlu0 %754
    %757 = vrot.lane.b32.xlu0 %v749, 64
    %v758 = vpop.permute.xlu0 %757
    %v760 = vsel %vm708, %v752, %v755
    %vm761 = vcmask 523264
    %v762 = vsel %vm761, %v760, %v758
    %s763 = sld [smem:[#allocation17 + $0xa]]
    %v764 = vstv %s763
    %v765 = vmul.f32 %v764, %v762
    %s766 = sld [smem:[#allocation17 + $0xb]]
    %v767 = vstv %s766
    %v768 = vmul.f32 %v767, %v762
    %770 = vrot.lane.b32.xlu0 %v768, 124
    %v771 = vpop.permute.xlu0 %770
    %v773 = vadd.f32 %v765, %v771
    %s774 = sld [smem:[#allocation17 + $0xc]]
    %v775 = vstv %s774
    %v776 = vmul.f32 %v775, %v762
    %778 = vrot.lane.b32.xlu0 %v776, 120
    %v779 = vpop.permute.xlu0 %778
    %v781 = vadd.f32 %v773, %v779
    %s782 = sld [smem:[#allocation17 + $0xd]]
    %v783 = vstv %s782
    %v784 = vmul.f32 %v783, %v762
    %786 = vrot.lane.b32.xlu0 %v784, 116
    %v787 = vpop.permute.xlu0 %786
    %v789 = vadd.f32 %v781, %v787
    %s790 = sld [smem:[#allocation17 + $0xe]]
    %v791 = vstv %s790
    %v792 = vmul.f32 %v791, %v762
    %794 = vrot.lane.b32.xlu0 %v792, 112
    %v795 = vpop.permute.xlu0 %794
    %v797 = vadd.f32 %v789, %v795
    %s798 = sld [smem:[#allocation18 + $0x2]]
    %v799 = vstv %s798
    %v800 = vadd.f32 %v797, %v799
    %v801 = vmax.f32 %v800, 0.0
    %v802 = vadd.f32 %v801, %v703
    %v803 = vmax.f32 %v802, 0.0
    %s804 = sld [smem:[#allocation26 + $0x1]]
    %v805 = vstv %s804
    %v806 = vmul.f32 %v803, %v805
    %808 = vrot.lane.b32.xlu0 %v806, 120
    %v809 = vpop.permute.xlu0 %808
    %v811 = vadd.f32 %v490, %v809
    %812 = vrot.lane.b32.xlu0 %v236, 102
    %v813 = vpop.permute.xlu0 %812
    %815 = vrot.lane.b32.xlu0 %v236, 6
    %v816 = vpop.permute.xlu0 %815
    %818 = vrot.lane.b32.xlu0 %v236, 38
    %v819 = vpop.permute.xlu0 %818
    %vm821 = vcmask 48128
    %v822 = vsel %vm821, %v813, %v816
    %vm823 = vcmask 310272
    %v824 = vsel %vm823, %v822, %v819
    %s825 = sld [smem:[#allocation20]]
    %v826 = vstv %s825
    %v827 = vmul.f32 %v826, %v824
    %s828 = sld [smem:[#allocation20 + $0x1]]
    %v829 = vstv %s828
    %v830 = vmul.f32 %v829, %v824
    %832 = vrot.lane.b32.xlu0 %v830, 127
    %v833 = vpop.permute.xlu0 %832
    %v835 = vadd.f32 %v827, %v833
    %s836 = sld [smem:[#allocation20 + $0x2]]
    %v837 = vstv %s836
    %v838 = vmul.f32 %v837, %v824
    %840 = vrot.lane.b32.xlu0 %v838, 126
    %v841 = vpop.permute.xlu0 %840
    %v843 = vadd.f32 %v835, %v841
    %s844 = sld [smem:[#allocation20 + $0x3]]
    %v845 = vstv %s844
    %v846 = vmul.f32 %v845, %v824
    %848 = vrot.lane.b32.xlu0 %v846, 125
    %v849 = vpop.permute.xlu0 %848
    %v851 = vadd.f32 %v843, %v849
    %s852 = sld [smem:[#allocation20 + $0x4]]
    %v853 = vstv %s852
    %v854 = vmul.f32 %v853, %v824
    %856 = vrot.lane.b32.xlu0 %v854, 124
    %v857 = vpop.permute.xlu0 %856
    %v859 = vadd.f32 %v851, %v857
    %s860 = sld [smem:[#allocation20 + $0x5]]
    %v861 = vstv %s860
    %v862 = vmul.f32 %v861, %v824
    %864 = vrot.lane.b32.xlu0 %v862, 123
    %v865 = vpop.permute.xlu0 %864
    %v867 = vadd.f32 %v859, %v865
    %s868 = sld [smem:[#allocation20 + $0x6]]
    %v869 = vstv %s868
    %v870 = vmul.f32 %v869, %v824
    %872 = vrot.lane.b32.xlu0 %v870, 122
    %v873 = vpop.permute.xlu0 %872
    %v875 = vadd.f32 %v867, %v873
    %s876 = sld [smem:[#allocation21]]
    %v877 = vstv %s876
    %v878 = vadd.f32 %v875, %v877
    %v879 = vmax.f32 %v878, 0.0
    %881 = vrot.lane.b32.xlu0 %v879, 96
    %v882 = vpop.permute.xlu0 %881
    %884 = vrot.lane.b32.xlu0 %v879, 6
    %v885 = vpop.permute.xlu0 %884
    %887 = vrot.lane.b32.xlu0 %v879, 44
    %v888 = vpop.permute.xlu0 %887
    %v890 = vsel %vm821, %v882, %v885
    %vm891 = vcmask 359424
    %v892 = vsel %vm891, %v890, %v888
    %s893 = sld [smem:[#allocation23]]
    %v894 = vstv %s893
    %v895 = vmul.f32 %v894, %v892
    %s896 = sld [smem:[#allocation23 + $0x1]]
    %v897 = vstv %s896
    %v898 = vmul.f32 %v897, %v892
    %900 = vrot.lane.b32.xlu0 %v898, 127
    %v901 = vpop.permute.xlu0 %900
    %v903 = vadd.f32 %v895, %v901
    %s904 = sld [smem:[#allocation23 + $0x2]]
    %v905 = vstv %s904
    %v906 = vmul.f32 %v905, %v892
    %908 = vrot.lane.b32.xlu0 %v906, 126
    %v909 = vpop.permute.xlu0 %908
    %v911 = vadd.f32 %v903, %v909
    %s912 = sld [smem:[#allocation23 + $0x3]]
    %v913 = vstv %s912
    %v914 = vmul.f32 %v913, %v892
    %916 = vrot.lane.b32.xlu0 %v914, 125
    %v917 = vpop.permute.xlu0 %916
    %v919 = vadd.f32 %v911, %v917
    %s920 = sld [smem:[#allocation23 + $0x4]]
    %v921 = vstv %s920
    %v922 = vmul.f32 %v921, %v892
    %924 = vrot.lane.b32.xlu0 %v922, 124
    %v925 = vpop.permute.xlu0 %924
    %v927 = vadd.f32 %v919, %v925
    %s928 = sld [smem:[#allocation23 + $0x5]]
    %v929 = vstv %s928
    %v930 = vmul.f32 %v929, %v892
    %932 = vrot.lane.b32.xlu0 %v930, 123
    %v933 = vpop.permute.xlu0 %932
    %v935 = vadd.f32 %v927, %v933
    %s936 = sld [smem:[#allocation23 + $0x6]]
    %v937 = vstv %s936
    %v938 = vmul.f32 %v937, %v892
    %940 = vrot.lane.b32.xlu0 %v938, 122
    %v941 = vpop.permute.xlu0 %940
    %v943 = vadd.f32 %v935, %v941
    %s944 = sld [smem:[#allocation24]]
    %v945 = vstv %s944
    %v946 = vadd.f32 %v943, %v945
    %v947 = vmax.f32 %v946, 0.0
    %v948 = vadd.f32 %v947, %v816
    %v949 = vmax.f32 %v948, 0.0
    %951 = vrot.lane.b32.xlu0 %v949, 102
    %v952 = vpop.permute.xlu0 %951
    %954 = vrot.lane.b32.xlu0 %v949, 6
    %v955 = vpop.permute.xlu0 %954
    %957 = vrot.lane.b32.xlu0 %v949, 38
    %v958 = vpop.permute.xlu0 %957
    %vm960 = vcmask 97280
    %v961 = vsel %vm960, %v952, %v955
    %v962 = vsel %vm891, %v961, %v958
    %s963 = sld [smem:[#allocation20 + $0x7]]
    %v964 = vstv %s963
    %v965 = vmul.f32 %v964, %v962
    %s966 = sld [smem:[#allocation20 + $0x8]]
    %v967 = vstv %s966
    %v968 = vmul.f32 %v967, %v962
    %970 = vrot.lane.b32.xlu0 %v968, 126
    %v971 = vpop.permute.xlu0 %970
    %v973 = vadd.f32 %v965, %v971
    %s974 = sld [smem:[#allocation20 + $0x9]]
    %v975 = vstv %s974
    %v976 = vmul.f32 %v975, %v962
    %978 = vrot.lane.b32.xlu0 %v976, 124
    %v979 = vpop.permute.xlu0 %978
    %v981 = vadd.f32 %v973, %v979
    %s982 = sld [smem:[#allocation20 + $0xa]]
    %v983 = vstv %s982
    %v984 = vmul.f32 %v983, %v962
    %986 = vrot.lane.b32.xlu0 %v984, 122
    %v987 = vpop.permute.xlu0 %986
    %v989 = vadd.f32 %v981, %v987
    %s990 = sld [smem:[#allocation20 + $0xb]]
    %v991 = vstv %s990
    %v992 = vmul.f32 %v991, %v962
    %994 = vrot.lane.b32.xlu0 %v992, 120
    %v995 = vpop.permute.xlu0 %994
    %v997 = vadd.f32 %v989, %v995
    %s998 = sld [smem:[#allocation20 + $0xc]]
    %v999 = vstv %s998
    %v1000 = vmul.f32 %v999, %v962
    %1002 = vrot.lane.b32.xlu0 %v1000, 118
    %v1003 = vpop.permute.xlu0 %1002
    %v1005 = vadd.f32 %v997, %v1003
    %s1006 = sld [smem:[#allocation20 + $0xd]]
    %v1007 = vstv %s1006
    %v1008 = vmul.f32 %v1007, %v962
    %1010 = vrot.lane.b32.xlu0 %v1008, 116
    %v1011 = vpop.permute.xlu0 %1010
    %v1013 = vadd.f32 %v1005, %v1011
    %s1014 = sld [smem:[#allocation21 + $0x1]]
    %v1015 = vstv %s1014
    %v1016 = vadd.f32 %v1013, %v1015
    %v1017 = vmax.f32 %v1016, 0.0
    %1019 = vrot.lane.b32.xlu0 %v1017, 96
    %v1020 = vpop.permute.xlu0 %1019
    %1022 = vrot.lane.b32.xlu0 %v1017, 12
    %v1023 = vpop.permute.xlu0 %1022
    %1025 = vrot.lane.b32.xlu0 %v1017, 56
    %v1026 = vpop.permute.xlu0 %1025
    %v1028 = vsel %vm960, %v1020, %v1023
    %vm1029 = vcmask 457728
    %v1030 = vsel %vm1029, %v1028, %v1026
    %s1031 = sld [smem:[#allocation23 + $0x7]]
    %v1032 = vstv %s1031
    %v1033 = vmul.f32 %v1032, %v1030
    %s1034 = sld [smem:[#allocation23 + $0x8]]
    %v1035 = vstv %s1034
    %v1036 = vmul.f32 %v1035, %v1030
    %1038 = vrot.lane.b32.xlu0 %v1036, 126
    %v1039 = vpop.permute.xlu0 %1038
    %v1041 = vadd.f32 %v1033, %v1039
    %s1042 = sld [smem:[#allocation23 + $0x9]]
    %v1043 = vstv %s1042
    %v1044 = vmul.f32 %v1043, %v1030
    %1046 = vrot.lane.b32.xlu0 %v1044, 124
    %v1047 = vpop.permute.xlu0 %1046
    %v1049 = vadd.f32 %v1041, %v1047
    %s1050 = sld [smem:[#allocation23 + $0xa]]
    %v1051 = vstv %s1050
    %v1052 = vmul.f32 %v1051, %v1030
    %1054 = vrot.lane.b32.xlu0 %v1052, 122
    %v1055 = vpop.permute.xlu0 %1054
    %v1057 = vadd.f32 %v1049, %v1055
    %s1058 = sld [smem:[#allocation23 + $0xb]]
    %v1059 = vstv %s1058
    %v1060 = vmul.f32 %v1059, %v1030
    %1062 = vrot.lane.b32.xlu0 %v1060, 120
    %v1063 = vpop.permute.xlu0 %1062
    %v1065 = vadd.f32 %v1057, %v1063
    %s1066 = sld [smem:[#allocation23 + $0xc]]
    %v1067 = vstv %s1066
    %v1068 = vmul.f32 %v1067, %v1030
    %1070 = vrot.lane.b32.xlu0 %v1068, 118
    %v1071 = vpop.permute.xlu0 %1070
    %v1073 = vadd.f32 %v1065, %v1071
    %s1074 = sld [smem:[#allocation23 + $0xd]]
    %v1075 = vstv %s1074
    %v1076 = vmul.f32 %v1075, %v1030
    %1078 = vrot.lane.b32.xlu0 %v1076, 116
    %v1079 = vpop.permute.xlu0 %1078
    %v1081 = vadd.f32 %v1073, %v1079
    %s1082 = sld [smem:[#allocation24 + $0x1]]
    %v1083 = vstv %s1082
    %v1084 = vadd.f32 %v1081, %v1083
    %v1085 = vmax.f32 %v1084, 0.0
    %v1086 = vadd.f32 %v1085, %v955
    %v1087 = vmax.f32 %v1086, 0.0
    %1089 = vrot.lane.b32.xlu0 %v1087, 108
    %v1090 = vpop.permute.xlu0 %1089
    %1092 = vrot.lane.b32.xlu0 %v1087, 12
    %v1093 = vpop.permute.xlu0 %1092
    %1095 = vrot.lane.b32.xlu0 %v1087, 44
    %v1096 = vpop.permute.xlu0 %1095
    %vm1098 = vcmask 195584
    %v1099 = vsel %vm1098, %v1090, %v1093
    %v1100 = vsel %vm1029, %v1099, %v1096
    %s1101 = sld [smem:[#allocation20 + $0xe]]
    %v1102 = vstv %s1101
    %v1103 = vmul.f32 %v1102, %v1100
    %s1104 = sld [smem:[#allocation20 + $0xf]]
    %v1105 = vstv %s1104
    %v1106 = vmul.f32 %v1105, %v1100
    %1108 = vrot.lane.b32.xlu0 %v1106, 124
    %v1109 = vpop.permute.xlu0 %1108
    %v1111 = vadd.f32 %v1103, %v1109
    %s1112 = sld [smem:[#allocation20 + $0x10]]
    %v1113 = vstv %s1112
    %v1114 = vmul.f32 %v1113, %v1100
    %1116 = vrot.lane.b32.xlu0 %v1114, 120
    %v1117 = vpop.permute.xlu0 %1116
    %v1119 = vadd.f32 %v1111, %v1117
    %s1120 = sld [smem:[#allocation20 + $0x11]]
    %v1121 = vstv %s1120
    %v1122 = vmul.f32 %v1121, %v1100
    %1124 = vrot.lane.b32.xlu0 %v1122, 116
    %v1125 = vpop.permute.xlu0 %1124
    %v1127 = vadd.f32 %v1119, %v1125
    %s1128 = sld [smem:[#allocation20 + $0x12]]
    %v1129 = vstv %s1128
    %v1130 = vmul.f32 %v1129, %v1100
    %1132 = vrot.lane.b32.xlu0 %v1130, 112
    %v1133 = vpop.permute.xlu0 %1132
    %v1135 = vadd.f32 %v1127, %v1133
    %s1136 = sld [smem:[#allocation20 + $0x13]]
    %v1137 = vstv %s1136
    %v1138 = vmul.f32 %v1137, %v1100
    %1140 = vrot.lane.b32.xlu0 %v1138, 108
    %v1141 = vpop.permute.xlu0 %1140
    %v1143 = vadd.f32 %v1135, %v1141
    %s1144 = sld [smem:[#allocation20 + $0x14]]
    %v1145 = vstv %s1144
    %v1146 = vmul.f32 %v1145, %v1100
    %1148 = vrot.lane.b32.xlu0 %v1146, 104
    %v1149 = vpop.permute.xlu0 %1148
    %v1151 = vadd.f32 %v1143, %v1149
    %s1152 = sld [smem:[#allocation21 + $0x2]]
    %v1153 = vstv %s1152
    %v1154 = vadd.f32 %v1151, %v1153
    %v1155 = vmax.f32 %v1154, 0.0
    %1157 = vrot.lane.b32.xlu0 %v1155, 96
    %v1158 = vpop.permute.xlu0 %1157
    %1160 = vrot.lane.b32.xlu0 %v1155, 24
    %v1161 = vpop.permute.xlu0 %1160
    %1163 = vrot.lane.b32.xlu0 %v1155, 80
    %v1164 = vpop.permute.xlu0 %1163
    %v1166 = vsel %vm1098, %v1158, %v1161
    %vm1167 = vcmask 654336
    %v1168 = vsel %vm1167, %v1166, %v1164
    %s1169 = sld [smem:[#allocation23 + $0xe]]
    %v1170 = vstv %s1169
    %v1171 = vmul.f32 %v1170, %v1168
    %s1172 = sld [smem:[#allocation23 + $0xf]]
    %v1173 = vstv %s1172
    %v1174 = vmul.f32 %v1173, %v1168
    %1176 = vrot.lane.b32.xlu0 %v1174, 124
    %v1177 = vpop.permute.xlu0 %1176
    %v1179 = vadd.f32 %v1171, %v1177
    %s1180 = sld [smem:[#allocation23 + $0x10]]
    %v1181 = vstv %s1180
    %v1182 = vmul.f32 %v1181, %v1168
    %1184 = vrot.lane.b32.xlu0 %v1182, 120
    %v1185 = vpop.permute.xlu0 %1184
    %v1187 = vadd.f32 %v1179, %v1185
    %s1188 = sld [smem:[#allocation23 + $0x11]]
    %v1189 = vstv %s1188
    %v1190 = vmul.f32 %v1189, %v1168
    %1192 = vrot.lane.b32.xlu0 %v1190, 116
    %v1193 = vpop.permute.xlu0 %1192
    %v1195 = vadd.f32 %v1187, %v1193
    %s1196 = sld [smem:[#allocation23 + $0x12]]
    %v1197 = vstv %s1196
    %v1198 = vmul.f32 %v1197, %v1168
    %1200 = vrot.lane.b32.xlu0 %v1198, 112
    %v1201 = vpop.permute.xlu0 %1200
    %v1203 = vadd.f32 %v1195, %v1201
    %s1204 = sld [smem:[#allocation23 + $0x13]]
    %v1205 = vstv %s1204
    %v1206 = vmul.f32 %v1205, %v1168
    %1208 = vrot.lane.b32.xlu0 %v1206, 108
    %v1209 = vpop.permute.xlu0 %1208
    %v1211 = vadd.f32 %v1203, %v1209
    %s1212 = sld [smem:[#allocation23 + $0x14]]
    %v1213 = vstv %s1212
    %v1214 = vmul.f32 %v1213, %v1168
    %1216 = vrot.lane.b32.xlu0 %v1214, 104
    %v1217 = vpop.permute.xlu0 %1216
    %v1219 = vadd.f32 %v1211, %v1217
    %s1220 = sld [smem:[#allocation24 + $0x2]]
    %v1221 = vstv %s1220
    %v1222 = vadd.f32 %v1219, %v1221
    %v1223 = vmax.f32 %v1222, 0.0
    %v1224 = vadd.f32 %v1223, %v1093
    %v1225 = vmax.f32 %v1224, 0.0
    %s1226 = sld [smem:[#allocation26 + $0x2]]
    %v1227 = vstv %s1226
    %v1228 = vmul.f32 %v1225, %v1227
    %1230 = vrot.lane.b32.xlu0 %v1228, 112
    %v1231 = vpop.permute.xlu0 %1230
    %v1233 = vadd.f32 %v811, %v1231
    %s1234 = sld [smem:[#allocation26 + $0x3]]
    %v1235 = vstv %s1234
    %v1236 = vmul.f32 %v249, %v1235
    %v1237 = vadd.f32 %v1233, %v1236
    %s1238 = sld [smem:[#allocation26 + $0x4]]
    %v1239 = vstv %s1238
    %v1240 = vmul.f32 %v252, %v1239
    %v1241 = vadd.f32 %v1237, %v1240
    %v1242 = vxor.u32 %v1241, 2147483648
    %v1243 = vmul.f32 %v1242, 1.442695
    %v1244 = vpow.pop %v1243
    %v1245 = vadd.f32 %v1244, 1.0
    %v1246 = vrcp.pop %v1245
    %v1247 = vmul.f32 %v1245, %v1246
    %v1248 = vsub.f32 1.0, %v1247
    %v1249 = vmul.f32 %v1246, %v1248
    %v1250 = vadd.f32 %v1246, %v1249
    %vm1251 = vweird.f32 %v1245
    %vm1252 = vweird.f32 %v1246
    %vm1253 = vmor %vm1251, %vm1252
    %v1254 = vsel %vm1253, %v1246, %v1250
    %v1255 = vand.u32 2147483647, %v1245
    %vm1256 = vcmp.eq.f32.partialorder %v1255, 8.507059e+37
    %v1257 = vand.u32 %v1245, 2147483648
    %v1258 = vor.u32 1.1754944e-38, %v1257
    %v1259 = vsel %vm1256, %v1258, %v1254
    %v1260 = vmul.f32 1.0, %v1259
    %1262 = vrot.lane.b32.xlu0 %v1260, 89
    %v1263 = vpop.permute.xlu0 %1262
    %vm1265 = vcmask 7168
    %1266 = vst.msk [vmem:[%s17] sm:$0xff] %vm1265, %v1263
    // Predicated region
    $region130: #{tpu_custom_call.1} parent=1 // pred_check
      _
    $region131: #{tpu_custom_call.1} parent=1 // pred_check_branch
      %1268 = sbr.rel (0) target = $region133
    $region132: #{tpu_custom_call.1} parent=1 // pred_region
      _
    $region133: #{tpu_custom_call.1} parent=1 // pred_fallthru
      _
    // Predicated region
    $region134: #{tpu_custom_call.1} parent=1 // pred_check
      _
    $region135: #{tpu_custom_call.1} parent=1 // pred_check_branch
      %1270 = sbr.rel (0) target = $region137
    $region136: #{tpu_custom_call.1} parent=1 // pred_region
      _
    $region137: #{tpu_custom_call.1} parent=1 // pred_fallthru
      _
    %1271 = vsyncpa [#allocation4], 1
    %1272 = vsyncpa [#allocation7], 1
    %1273 = vsyncpa [#allocation5], 1
    %1274 = vsyncpa [#allocation10], 1
    %1275 = vsyncpa [#allocation13], 1
    %1276 = vsyncpa [#allocation16], 1
    %1277 = vsyncpa [#allocation19], 1
    %1278 = vsyncpa [#allocation22], 1
    %1279 = vsyncpa [#allocation25], 1

</llo_original>
